<compile_context>
chip_gen: v7x
topology: tpu7x:2x2x1
jax: 0.10.0
libtpu: 0.0.40
codegen_flags: <defaults>
</compile_context>

<pallas_src>
import functools
import math

import jax
import jax.numpy as jnp
from jax.experimental import pallas as pl
from jax.experimental.pallas import tpu as pltpu


# ----------------------------- kernel helpers -------------------------------


def _rmsnorm(x, w, eps):
    # statistics in f32; rsqrt maps to the EUP
    var = jnp.mean(x * x, axis=-1, keepdims=True)
    return x * jax.lax.rsqrt(var + eps) * w


def _rope(x, cos, sin_a, sin_b):
    # Interleaved-pair rotation rotate(x)[2i] = -x[2i+1], rotate(x)[2i+1]=x[2i]
    # expressed as two lane rolls along head_dim; the +/- sign and even/odd
    # parity are pre-baked into sin_a / sin_b (zero lanes kill the wraparound
    # terms).  x is (H, S, hd); cos/sin are (S, hd) and broadcast over heads.
    return (x * cos
            + jnp.roll(x, -1, axis=-1) * sin_a
            + jnp.roll(x, 1, axis=-1) * sin_b)


# ------------------------------- kernels ------------------------------------


def stack_kernel(seq_ref, x_ref, an_ref, wq_ref, wk_ref, wv_ref, wo_ref,
                 fn_ref, w1_ref, w3_ref, w2_ref, cos_ref, sa_ref, sb_ref,
                 o_ref, *, num_heads, head_dim, eps):
    # grid = (batch, layer-step); o_ref is the VMEM-resident residual stream
    # carried across the sequential layer axis (same output block every step).
    step = pl.program_id(1)

    @pl.when(step == 0)
    def _():
        o_ref[0] = x_ref[0]                      # load activations once per b

    x = o_ref[0]                                 # (S, D) f32 residual stream
    cos, sin_a, sin_b = cos_ref[...], sa_ref[...], sb_ref[...]   # (S, hd)

    H, hd = num_heads, head_dim
    scale = 1.0 / math.sqrt(hd)

    # ---- attention sub-block: x + wo(attn(rope(q), rope(k), v)) ----
    xn = _rmsnorm(x, an_ref[0], eps)
    xb = xn.astype(jnp.bfloat16)                 # bf16 into MXU, f32 accumulate
    q = jnp.dot(xb, wq_ref[0], preferred_element_type=jnp.float32)
    k = jnp.dot(xb, wk_ref[0], preferred_element_type=jnp.float32)
    v = jnp.dot(xb, wv_ref[0],
                preferred_element_type=jnp.float32).astype(jnp.bfloat16)

    def heads(t):                                # (S, D) -> (H, S, hd)
        return jnp.stack([t[:, h * hd:(h + 1) * hd] for h in range(H)], axis=0)

    # RoPE on per-head slabs in f32; softmax scale folded into q before cast.
    qh = (_rope(heads(q), cos, sin_a, sin_b) * scale).astype(jnp.bfloat16)
    kh = _rope(heads(k), cos, sin_a, sin_b).astype(jnp.bfloat16)
    vh = heads(v)                                # bf16, no RoPE

    # Batched-head contractions (single MXU dispatch over all heads).
    s = jnp.einsum("hqd,hkd->hqk", qh, kh,
                   preferred_element_type=jnp.float32)
    # mask=None in the reference forward -> plain (unmasked) softmax, f32.
    m = jnp.max(s, axis=-1, keepdims=True)
    p = jnp.exp(s - m)
    p = p * pl.reciprocal(jnp.sum(p, axis=-1, keepdims=True), approx=True)
    attn = jnp.einsum("hqk,hkd->hqd", p.astype(jnp.bfloat16), vh,
                      preferred_element_type=jnp.float32)      # (H, S, hd)

    # merge heads back to (S, D) along lanes, cast once for the wo matmul
    attn = jnp.concatenate([attn[h] for h in range(H)],
                           axis=-1).astype(jnp.bfloat16)
    h1 = x + jnp.dot(attn, wo_ref[0], preferred_element_type=jnp.float32)

    # ---- feed-forward sub-block: h1 + w2(silu(w1(n)) * w3(n)) ----
    hn = _rmsnorm(h1, fn_ref[0], eps)
    hb = hn.astype(jnp.bfloat16)
    g = jnp.dot(hb, w1_ref[0], preferred_element_type=jnp.float32)
    u = jnp.dot(hb, w3_ref[0], preferred_element_type=jnp.float32)
    ff = jnp.dot((jax.nn.silu(g) * u).astype(jnp.bfloat16), w2_ref[0],
                 preferred_element_type=jnp.float32)

    o_ref[0] = h1 + ff                           # carried; flushed once per b


def head_kernel(x_ref, nw_ref, wout_ref, o_ref, *, eps):
    # TODO(synk): RMSNorm is recomputed per V tile; negligible vs the matmul.
    xn = _rmsnorm(x_ref[0], nw_ref[...], eps)
    o_ref[0] = jnp.dot(xn.astype(jnp.bfloat16), wout_ref[...],
                       preferred_element_type=jnp.float32)


# ------------------------------- wrappers ------------------------------------


def transformer_stack(x, layers, cos, sin_a, sin_b, layer_seq, *,
                      num_heads, head_dim, eps):
    B, S, D = x.shape
    Hf = layers["w1"].shape[2]
    T = layer_seq.shape[0]
    hd = head_dim
    kern = functools.partial(stack_kernel, num_heads=num_heads,
                             head_dim=head_dim, eps=eps)

    def wspec(*shape):
        # per-layer weight block, layer selected from the prefetched schedule
        return pl.BlockSpec((1,) + shape,
                            lambda b, l, seq: (seq[l],) + (0,) * len(shape))

    grid_spec = pltpu.PrefetchScalarGridSpec(
        num_scalar_prefetch=1,
        grid=(B, T),                                       # layer axis innermost
        in_specs=[
            pl.BlockSpec((1, S, D), lambda b, l, seq: (b, 0, 0)),   # x
            wspec(1, D),                                            # attn_norm
            wspec(D, D), wspec(D, D), wspec(D, D), wspec(D, D),     # wq wk wv wo
            wspec(1, D),                                            # ffn_norm
            wspec(D, Hf), wspec(D, Hf), wspec(Hf, D),               # w1 w3 w2
            pl.BlockSpec((S, hd), lambda b, l, seq: (0, 0)),        # cos
            pl.BlockSpec((S, hd), lambda b, l, seq: (0, 0)),        # sin_a
            pl.BlockSpec((S, hd), lambda b, l, seq: (0, 0)),        # sin_b
        ],
        out_specs=pl.BlockSpec((1, S, D), lambda b, l, seq: (b, 0, 0)),
    )
    return pl.pallas_call(
        kern,
        out_shape=jax.ShapeDtypeStruct((B, S, D), jnp.float32),
        grid_spec=grid_spec,
        # alias the activations input (operand 1: after the prefetch scalar)
        # to the output residual stream
        input_output_aliases={1: 0},
        compiler_params=pltpu.CompilerParams(
            dimension_semantics=("parallel", "arbitrary"),
            vmem_limit_bytes=64 * 1024 * 1024),
    )(layer_seq, x, layers["attn_norm"], layers["wq"], layers["wk"],
      layers["wv"], layers["wo"], layers["ffn_norm"], layers["w1"],
      layers["w3"], layers["w2"], cos, sin_a, sin_b)


def output_head(h, norm_w, wout, *, eps):
    B, S, D = h.shape
    V = wout.shape[1]
    if V % 256 == 0:
        tn = 256                        # lane-dense, fills v6e/v7x MXU width
    elif V % 128 == 0:
        tn = 128
    else:
        tn = V                          # tiny demo vocab: single tile
    kern = functools.partial(head_kernel, eps=eps)
    return pl.pallas_call(
        kern,
        out_shape=jax.ShapeDtypeStruct((B, S, V), jnp.float32),
        grid=(B, V // tn),
        in_specs=[
            pl.BlockSpec((1, S, D), lambda b, j: (b, 0, 0)),
            pl.BlockSpec((1, D), lambda b, j: (0, 0)),
            pl.BlockSpec((D, tn), lambda b, j: (0, j)),
        ],
        out_specs=pl.BlockSpec((1, S, tn), lambda b, j: (b, 0, j)),
        compiler_params=pltpu.CompilerParams(
            dimension_semantics=("parallel", "parallel"),
            vmem_limit_bytes=64 * 1024 * 1024),
    )(h, norm_w, wout)


def llama_forward(tokens, params, exec_order, *, num_heads, head_dim, eps):
    # embedding lookup (glue, plain JAX)
    h = jnp.take(params["embedding"], tokens, axis=0).astype(jnp.float32)
    # CustomSeq semantics: layer 0 first, exec_order[0] skipped, then
    # exec_order[1:] in order.  The whole sequence runs in one pallas_call.
    layer_seq = jnp.asarray([0] + list(exec_order[1:]), dtype=jnp.int32)
    h = transformer_stack(h, params["layers"], params["cos"], params["sin_a"],
                          params["sin_b"], layer_seq, num_heads=num_heads,
                          head_dim=head_dim, eps=eps)
    return output_head(h, params["final_norm"], params["wout"], eps=eps)


# ----------------------- param / rope construction --------------------------


def precompute_rope(head_dim, seq_len, theta=10000.0):
    inv = 1.0 / (theta ** (jnp.arange(0, head_dim, 2, dtype=jnp.float32)
                           / head_dim))
    t = jnp.arange(seq_len, dtype=jnp.float32)
    freqs = jnp.outer(t, inv)                          # (S, hd/2)
    cos = jnp.repeat(jnp.cos(freqs), 2, axis=-1)       # (S, hd) interleaved
    sin = jnp.repeat(jnp.sin(freqs), 2, axis=-1)
    parity = jnp.tile(jnp.array([0.0, 1.0], jnp.float32), head_dim // 2)
    sin_a = -sin * (1.0 - parity)   # -sin on even lanes, 0 on odd
    sin_b = sin * parity            # +sin on odd lanes, 0 on even
    # parity-layout sanity check (roll-based RoPE relies on these zero lanes)
    assert bool(jnp.all(sin_a[:, 1::2] == 0.0))
    assert bool(jnp.all(sin_b[:, 0::2] == 0.0))
    return cos, sin_a, sin_b


def ffn_hidden_dim(dmodel, multiple_of, ffn_dim_multiplier=None):
    hidden = 4 * dmodel
    hidden = int(2 * hidden / 3)
    if ffn_dim_multiplier is not None:
        hidden = int(ffn_dim_multiplier * hidden)
    return multiple_of * ((hidden + multiple_of - 1) // multiple_of)


def init_params(key, vocab, dmodel, num_heads, multiple_of, n_layers, seq_len):
    hidden = ffn_hidden_dim(dmodel, multiple_of)
    counter = iter(range(1_000_000))

    def w(shape, scale=0.05, dtype=jnp.bfloat16):
        k = jax.random.fold_in(key, next(counter))
        return (jax.random.normal(k, shape, jnp.float32) * scale).astype(dtype)

    def norm_w(shape):
        k = jax.random.fold_in(key, next(counter))
        return 1.0 + 0.1 * jax.random.normal(k, shape, jnp.float32)

    L = n_layers
    layers = dict(
        attn_norm=norm_w((L, 1, dmodel)),
        ffn_norm=norm_w((L, 1, dmodel)),
        wq=w((L, dmodel, dmodel)), wk=w((L, dmodel, dmodel)),
        wv=w((L, dmodel, dmodel)), wo=w((L, dmodel, dmodel)),
        w1=w((L, dmodel, hidden)), w3=w((L, dmodel, hidden)),
        w2=w((L, hidden, dmodel)),
    )
    cos, sin_a, sin_b = precompute_rope(dmodel // num_heads, seq_len)
    return dict(
        embedding=w((vocab, dmodel), scale=0.1, dtype=jnp.float32),
        layers=layers,
        final_norm=norm_w((1, dmodel)),
        wout=w((dmodel, vocab)),                       # bf16
        cos=cos, sin_a=sin_a, sin_b=sin_b,             # (S, head_dim) tables
    )


# ------------------------------- reference -----------------------------------


def reference_forward(tokens, params, exec_order, *, num_heads, head_dim, eps):
    # Pure-JAX reference mirroring the kernel's mixed-precision policy
    # (bf16 matmul inputs, f32 accumulation / statistics, scale folded into q).
    h = jnp.take(params["embedding"], tokens, axis=0).astype(jnp.float32)
    cos, sin_a, sin_b = params["cos"], params["sin_a"], params["sin_b"]
    scale = 1.0 / math.sqrt(head_dim)

    def mm(a, b):
        return jnp.dot(a.astype(jnp.bfloat16), b.astype(jnp.bfloat16),
                       preferred_element_type=jnp.float32)

    def norm(x, wgt):
        return x * jax.lax.rsqrt(jnp.mean(x * x, -1, keepdims=True) + eps) * wgt

    def rope(t):                    # t: (B, H, S, hd); tables (S, hd)
        return (t * cos + jnp.roll(t, -1, axis=-1) * sin_a
                + jnp.roll(t, 1, axis=-1) * sin_b)

    def block(x, i):
        lp = {k: v[i] for k, v in params["layers"].items()}
        B, S, D = x.shape
        xn = norm(x, lp["attn_norm"])
        q, k, v = mm(xn, lp["wq"]), mm(xn, lp["wk"]), mm(xn, lp["wv"])
        qh = q.reshape(B, S, num_heads, head_dim).transpose(0, 2, 1, 3)
        kh = k.reshape(B, S, num_heads, head_dim).transpose(0, 2, 1, 3)
        vh = v.reshape(B, S, num_heads, head_dim).transpose(0, 2, 1, 3)
        qh = (rope(qh) * scale).astype(jnp.bfloat16)
        kh = rope(kh).astype(jnp.bfloat16)
        vh = vh.astype(jnp.bfloat16)
        sc = jnp.einsum("bhqd,bhkd->bhqk", qh, kh,
                        preferred_element_type=jnp.float32)
        p = jax.nn.softmax(sc, axis=-1)
        a = jnp.einsum("bhqk,bhkd->bhqd", p.astype(jnp.bfloat16), vh,
                       preferred_element_type=jnp.float32)
        a = a.transpose(0, 2, 1, 3).reshape(B, S, D)
        h1 = x + mm(a, lp["wo"])
        hn = norm(h1, lp["ffn_norm"])
        return h1 + mm(jax.nn.silu(mm(hn, lp["w1"])) * mm(hn, lp["w3"]),
                       lp["w2"])

    for i in [0] + list(exec_order[1:]):
        h = block(h, i)
    return mm(norm(h, params["final_norm"]), params["wout"])


# --------------------------------- main ---------------------------------------


if __name__ == "__main__":
    # NOTE: toy shapes (sub-128 lane dims -> masked stores); benchmark only
    # with D / head_dim / hidden / vocab as multiples of 128 (256 on v6e/v7x).
    B, S = 2, 8
    vocab, dmodel, num_heads, multiple_of, n_layers = 64, 32, 4, 32, 3
    head_dim = dmodel // num_heads
    eps = 1e-5

    key = jax.random.PRNGKey(0)
    k_tok, k_par = jax.random.split(key)
    params = init_params(k_par, vocab, dmodel, num_heads, multiple_of,
                         n_layers, S)
    tokens = jax.random.randint(k_tok, (B, S), 0, vocab, dtype=jnp.int32)
    # CustomSeq: layer 0 always first, exec_order[0] skipped, then the rest ->
    # executed layer sequence is [0, 2, 1].
    exec_order = [0, 2, 1]

    out = llama_forward(tokens, params, exec_order,
                        num_heads=num_heads, head_dim=head_dim, eps=eps)
    out = jax.block_until_ready(out)

    ref = reference_forward(tokens, params, exec_order,
                            num_heads=num_heads, head_dim=head_dim, eps=eps)
    assert out.shape == (B, S, vocab) and out.dtype == jnp.float32
    max_err = float(jnp.max(jnp.abs(out - ref)))
    assert jnp.allclose(out, ref, atol=2e-2, rtol=2e-2), \
        f"mismatch vs reference, max abs err = {max_err}"

    print("KERNEL_OK")
</pallas_src>

<mosaic_0001>
module attributes {stable_mosaic.version = 11 : i64} {
  func.func @stack_kernel(%arg0: i32, %arg1: i32, %arg2: memref<3xi32, #tpu.memory_space<smem>>, %arg3: memref<1x8x32xf32, #tpu.memory_space<vmem>>, %arg4: memref<1x1x32xf32, #tpu.memory_space<vmem>>, %arg5: memref<1x32x32xbf16, #tpu.memory_space<vmem>>, %arg6: memref<1x32x32xbf16, #tpu.memory_space<vmem>>, %arg7: memref<1x32x32xbf16, #tpu.memory_space<vmem>>, %arg8: memref<1x32x32xbf16, #tpu.memory_space<vmem>>, %arg9: memref<1x1x32xf32, #tpu.memory_space<vmem>>, %arg10: memref<1x32x96xbf16, #tpu.memory_space<vmem>>, %arg11: memref<1x32x96xbf16, #tpu.memory_space<vmem>>, %arg12: memref<1x96x32xbf16, #tpu.memory_space<vmem>>, %arg13: memref<8x8xf32, #tpu.memory_space<vmem>>, %arg14: memref<8x8xf32, #tpu.memory_space<vmem>>, %arg15: memref<8x8xf32, #tpu.memory_space<vmem>>, %arg16: memref<1x8x32xf32, #tpu.memory_space<vmem>>) attributes {dimension_semantics = [#tpu.dimension_semantics<parallel>, #tpu.dimension_semantics<arbitrary>], iteration_bounds = array<i64: 2, 3>, scalar_prefetch = 1 : i64, scratch_operands = 0 : i64, tpu.core_type = #tpu.core_type<tc>, window_params = [{transform_indices = @transform_0, window_bounds = array<i64: 1, 8, 32>}, {transform_indices = @transform_1, window_bounds = array<i64: 1, 1, 32>}, {transform_indices = @transform_2, window_bounds = array<i64: 1, 32, 32>}, {transform_indices = @transform_3, window_bounds = array<i64: 1, 32, 32>}, {transform_indices = @transform_4, window_bounds = array<i64: 1, 32, 32>}, {transform_indices = @transform_5, window_bounds = array<i64: 1, 32, 32>}, {transform_indices = @transform_6, window_bounds = array<i64: 1, 1, 32>}, {transform_indices = @transform_7, window_bounds = array<i64: 1, 32, 96>}, {transform_indices = @transform_8, window_bounds = array<i64: 1, 32, 96>}, {transform_indices = @transform_9, window_bounds = array<i64: 1, 96, 32>}, {pipeline_mode = #tpu.pipeline_mode<synchronous>, transform_indices = @transform_10, window_bounds = array<i64: 8, 8>}, {pipeline_mode = #tpu.pipeline_mode<synchronous>, transform_indices = @transform_11, window_bounds = array<i64: 8, 8>}, {pipeline_mode = #tpu.pipeline_mode<synchronous>, transform_indices = @transform_12, window_bounds = array<i64: 8, 8>}, {transform_indices = @transform_13, window_bounds = array<i64: 1, 8, 32>}]} {
    %c0_i32 = arith.constant 0 : i32
    %0 = arith.cmpi eq, %arg1, %c0_i32 : i32
    %1 = arith.extui %0 : i1 to i32
    %c0_i32_0 = arith.constant 0 : i32
    %2 = arith.cmpi ne, %1, %c0_i32_0 : i32
    scf.if %2 {
      %c0_57 = arith.constant 0 : index
      %c0_58 = arith.constant 0 : index
      %c0_59 = arith.constant 0 : index
      %161 = vector.load %arg3[%c0_57, %c0_58, %c0_59] : memref<1x8x32xf32, #tpu.memory_space<vmem>>, vector<1x8x32xf32>
      %162 = vector.shape_cast %161 : vector<1x8x32xf32> to vector<8x32xf32>
      %c0_60 = arith.constant 0 : index
      %c0_61 = arith.constant 0 : index
      %c0_62 = arith.constant 0 : index
      %163 = vector.load %arg16[%c0_60, %c0_61, %c0_62] : memref<1x8x32xf32, #tpu.memory_space<vmem>>, vector<1x8x32xf32>
      %164 = vector.shape_cast %163 : vector<1x8x32xf32> to vector<8x32xf32>
      %165 = vector.shape_cast %162 : vector<8x32xf32> to vector<1x8x32xf32>
      tpu.vector_store %arg16[%c0_60, %c0_61, %c0_62], %165 {strides = array<i32>} : memref<1x8x32xf32, #tpu.memory_space<vmem>>, vector<1x8x32xf32>,
    } else {
    }
    %c0 = arith.constant 0 : index
    %c0_1 = arith.constant 0 : index
    %c0_2 = arith.constant 0 : index
    %3 = vector.load %arg16[%c0, %c0_1, %c0_2] : memref<1x8x32xf32, #tpu.memory_space<vmem>>, vector<1x8x32xf32>
    %4 = vector.shape_cast %3 : vector<1x8x32xf32> to vector<8x32xf32>
    %c0_3 = arith.constant 0 : index
    %c0_4 = arith.constant 0 : index
    %5 = vector.load %arg13[%c0_3, %c0_4] : memref<8x8xf32, #tpu.memory_space<vmem>>, vector<8x8xf32>
    %c0_5 = arith.constant 0 : index
    %c0_6 = arith.constant 0 : index
    %6 = vector.load %arg14[%c0_5, %c0_6] : memref<8x8xf32, #tpu.memory_space<vmem>>, vector<8x8xf32>
    %c0_7 = arith.constant 0 : index
    %c0_8 = arith.constant 0 : index
    %7 = vector.load %arg15[%c0_7, %c0_8] : memref<8x8xf32, #tpu.memory_space<vmem>>, vector<8x8xf32>
    %c0_9 = arith.constant 0 : index
    %c0_10 = arith.constant 0 : index
    %c0_11 = arith.constant 0 : index
    %8 = vector.load %arg4[%c0_9, %c0_10, %c0_11] : memref<1x1x32xf32, #tpu.memory_space<vmem>>, vector<1x1x32xf32>
    %9 = vector.shape_cast %8 : vector<1x1x32xf32> to vector<1x32xf32>
    %10 = arith.mulf %4, %4 : vector<8x32xf32>
    %cst = arith.constant dense<0.000000e+00> : vector<8xf32>
    %11 = vector.multi_reduction <add>, %10, %cst [1] : vector<8x32xf32> to vector<8xf32>
    %12 = vector.shape_cast %11 : vector<8xf32> to vector<8x1xf32>
    %cst_12 = arith.constant 3.200000e+01 : f32
    %13 = vector.broadcast %cst_12 : f32 to vector<8x1xf32>
    %14 = arith.divf %12, %13 : vector<8x1xf32>
    %cst_13 = arith.constant 9.99999974E-6 : f32
    %15 = vector.broadcast %cst_13 : f32 to vector<8x1xf32>
    %16 = arith.addf %14, %15 : vector<8x1xf32>
    %17 = math.rsqrt %16 : vector<8x1xf32>
    %18 = vector.broadcast %17 : vector<8x1xf32> to vector<8x32xf32>
    %19 = arith.mulf %4, %18 : vector<8x32xf32>
    %20 = vector.broadcast %9 : vector<1x32xf32> to vector<8x32xf32>
    %21 = arith.mulf %19, %20 : vector<8x32xf32>
    %22 = arith.truncf %21 : vector<8x32xf32> to vector<8x32xbf16>
    %c0_14 = arith.constant 0 : index
    %c0_15 = arith.constant 0 : index
    %c0_16 = arith.constant 0 : index
    %23 = vector.load %arg5[%c0_14, %c0_15, %c0_16] : memref<1x32x32xbf16, #tpu.memory_space<vmem>>, vector<1x32x32xbf16>
    %24 = vector.shape_cast %23 : vector<1x32x32xbf16> to vector<32x32xbf16>
    %cst_17 = arith.constant dense<0.000000e+00> : vector<8x32xf32>
    %25 = tpu.matmul %22, %24, %cst_17 {dimension_numbers = #tpu.dot_dimension_numbers<[1], [0], [0], [1], [0, 0, 1, 1], [], []>} : vector<8x32xbf16>, vector<32x32xbf16>, vector<8x32xf32> -> vector<8x32xf32>
    %c0_18 = arith.constant 0 : index
    %c0_19 = arith.constant 0 : index
    %c0_20 = arith.constant 0 : index
    %26 = vector.load %arg6[%c0_18, %c0_19, %c0_20] : memref<1x32x32xbf16, #tpu.memory_space<vmem>>, vector<1x32x32xbf16>
    %27 = vector.shape_cast %26 : vector<1x32x32xbf16> to vector<32x32xbf16>
    %cst_21 = arith.constant dense<0.000000e+00> : vector<8x32xf32>
    %28 = tpu.matmul %22, %27, %cst_21 {dimension_numbers = #tpu.dot_dimension_numbers<[1], [0], [0], [1], [0, 0, 1, 1], [], []>} : vector<8x32xbf16>, vector<32x32xbf16>, vector<8x32xf32> -> vector<8x32xf32>
    %c0_22 = arith.constant 0 : index
    %c0_23 = arith.constant 0 : index
    %c0_24 = arith.constant 0 : index
    %29 = vector.load %arg7[%c0_22, %c0_23, %c0_24] : memref<1x32x32xbf16, #tpu.memory_space<vmem>>, vector<1x32x32xbf16>
    %30 = vector.shape_cast %29 : vector<1x32x32xbf16> to vector<32x32xbf16>
    %cst_25 = arith.constant dense<0.000000e+00> : vector<8x32xf32>
    %31 = tpu.matmul %22, %30, %cst_25 {dimension_numbers = #tpu.dot_dimension_numbers<[1], [0], [0], [1], [0, 0, 1, 1], [], []>} : vector<8x32xbf16>, vector<32x32xbf16>, vector<8x32xf32> -> vector<8x32xf32>
    %32 = arith.truncf %31 : vector<8x32xf32> to vector<8x32xbf16>
    %33 = vector.extract_strided_slice %25 {offsets = [0, 0], sizes = [8, 8], strides = [1, 1]} : vector<8x32xf32> to vector<8x8xf32>
    %34 = vector.extract_strided_slice %25 {offsets = [0, 8], sizes = [8, 8], strides = [1, 1]} : vector<8x32xf32> to vector<8x8xf32>
    %35 = vector.extract_strided_slice %25 {offsets = [0, 16], sizes = [8, 8], strides = [1, 1]} : vector<8x32xf32> to vector<8x8xf32>
    %36 = vector.extract_strided_slice %25 {offsets = [0, 24], sizes = [8, 8], strides = [1, 1]} : vector<8x32xf32> to vector<8x8xf32>
    %37 = vector.shape_cast %33 : vector<8x8xf32> to vector<1x8x8xf32>
    %38 = vector.shape_cast %34 : vector<8x8xf32> to vector<1x8x8xf32>
    %39 = vector.shape_cast %35 : vector<8x8xf32> to vector<1x8x8xf32>
    %40 = vector.shape_cast %36 : vector<8x8xf32> to vector<1x8x8xf32>
    %41 = tpu.concatenate %37, %38, %39, %40 in 0 : vector<1x8x8xf32>, vector<1x8x8xf32>, vector<1x8x8xf32>, vector<1x8x8xf32> -> vector<4x8x8xf32>
    %42 = vector.shape_cast %5 : vector<8x8xf32> to vector<1x8x8xf32>
    %43 = vector.broadcast %42 : vector<1x8x8xf32> to vector<4x8x8xf32>
    %44 = arith.mulf %41, %43 : vector<4x8x8xf32>
    %45 = vector.extract_strided_slice %41 {offsets = [0, 0, 1], sizes = [4, 8, 7], strides = [1, 1, 1]} : vector<4x8x8xf32> to vector<4x8x7xf32>
    %46 = vector.extract_strided_slice %41 {offsets = [0, 0, 0], sizes = [4, 8, 1], strides = [1, 1, 1]} : vector<4x8x8xf32> to vector<4x8x1xf32>
    %47 = tpu.concatenate %45, %46 in 2 : vector<4x8x7xf32>, vector<4x8x1xf32> -> vector<4x8x8xf32>
    %48 = vector.shape_cast %6 : vector<8x8xf32> to vector<1x8x8xf32>
    %49 = vector.broadcast %48 : vector<1x8x8xf32> to vector<4x8x8xf32>
    %50 = arith.mulf %47, %49 : vector<4x8x8xf32>
    %51 = arith.addf %44, %50 : vector<4x8x8xf32>
    %52 = vector.extract_strided_slice %41 {offsets = [0, 0, 7], sizes = [4, 8, 1], strides = [1, 1, 1]} : vector<4x8x8xf32> to vector<4x8x1xf32>
    %53 = vector.extract_strided_slice %41 {offsets = [0, 0, 0], sizes = [4, 8, 7], strides = [1, 1, 1]} : vector<4x8x8xf32> to vector<4x8x7xf32>
    %54 = tpu.concatenate %52, %53 in 2 : vector<4x8x1xf32>, vector<4x8x7xf32> -> vector<4x8x8xf32>
    %55 = vector.shape_cast %7 : vector<8x8xf32> to vector<1x8x8xf32>
    %56 = vector.broadcast %55 : vector<1x8x8xf32> to vector<4x8x8xf32>
    %57 = arith.mulf %54, %56 : vector<4x8x8xf32>
    %58 = arith.addf %51, %57 : vector<4x8x8xf32>
    %cst_26 = arith.constant 0.353553385 : f32
    %59 = vector.broadcast %cst_26 : f32 to vector<4x8x8xf32>
    %60 = arith.mulf %58, %59 : vector<4x8x8xf32>
    %61 = arith.truncf %60 : vector<4x8x8xf32> to vector<4x8x8xbf16>
    %62 = vector.extract_strided_slice %28 {offsets = [0, 0], sizes = [8, 8], strides = [1, 1]} : vector<8x32xf32> to vector<8x8xf32>
    %63 = vector.extract_strided_slice %28 {offsets = [0, 8], sizes = [8, 8], strides = [1, 1]} : vector<8x32xf32> to vector<8x8xf32>
    %64 = vector.extract_strided_slice %28 {offsets = [0, 16], sizes = [8, 8], strides = [1, 1]} : vector<8x32xf32> to vector<8x8xf32>
    %65 = vector.extract_strided_slice %28 {offsets = [0, 24], sizes = [8, 8], strides = [1, 1]} : vector<8x32xf32> to vector<8x8xf32>
    %66 = vector.shape_cast %62 : vector<8x8xf32> to vector<1x8x8xf32>
    %67 = vector.shape_cast %63 : vector<8x8xf32> to vector<1x8x8xf32>
    %68 = vector.shape_cast %64 : vector<8x8xf32> to vector<1x8x8xf32>
    %69 = vector.shape_cast %65 : vector<8x8xf32> to vector<1x8x8xf32>
    %70 = tpu.concatenate %66, %67, %68, %69 in 0 : vector<1x8x8xf32>, vector<1x8x8xf32>, vector<1x8x8xf32>, vector<1x8x8xf32> -> vector<4x8x8xf32>
    %71 = vector.shape_cast %5 : vector<8x8xf32> to vector<1x8x8xf32>
    %72 = vector.broadcast %71 : vector<1x8x8xf32> to vector<4x8x8xf32>
    %73 = arith.mulf %70, %72 : vector<4x8x8xf32>
    %74 = vector.extract_strided_slice %70 {offsets = [0, 0, 1], sizes = [4, 8, 7], strides = [1, 1, 1]} : vector<4x8x8xf32> to vector<4x8x7xf32>
    %75 = vector.extract_strided_slice %70 {offsets = [0, 0, 0], sizes = [4, 8, 1], strides = [1, 1, 1]} : vector<4x8x8xf32> to vector<4x8x1xf32>
    %76 = tpu.concatenate %74, %75 in 2 : vector<4x8x7xf32>, vector<4x8x1xf32> -> vector<4x8x8xf32>
    %77 = vector.shape_cast %6 : vector<8x8xf32> to vector<1x8x8xf32>
    %78 = vector.broadcast %77 : vector<1x8x8xf32> to vector<4x8x8xf32>
    %79 = arith.mulf %76, %78 : vector<4x8x8xf32>
    %80 = arith.addf %73, %79 : vector<4x8x8xf32>
    %81 = vector.extract_strided_slice %70 {offsets = [0, 0, 7], sizes = [4, 8, 1], strides = [1, 1, 1]} : vector<4x8x8xf32> to vector<4x8x1xf32>
    %82 = vector.extract_strided_slice %70 {offsets = [0, 0, 0], sizes = [4, 8, 7], strides = [1, 1, 1]} : vector<4x8x8xf32> to vector<4x8x7xf32>
    %83 = tpu.concatenate %81, %82 in 2 : vector<4x8x1xf32>, vector<4x8x7xf32> -> vector<4x8x8xf32>
    %84 = vector.shape_cast %7 : vector<8x8xf32> to vector<1x8x8xf32>
    %85 = vector.broadcast %84 : vector<1x8x8xf32> to vector<4x8x8xf32>
    %86 = arith.mulf %83, %85 : vector<4x8x8xf32>
    %87 = arith.addf %80, %86 : vector<4x8x8xf32>
    %88 = arith.truncf %87 : vector<4x8x8xf32> to vector<4x8x8xbf16>
    %89 = vector.extract_strided_slice %32 {offsets = [0, 0], sizes = [8, 8], strides = [1, 1]} : vector<8x32xbf16> to vector<8x8xbf16>
    %90 = vector.extract_strided_slice %32 {offsets = [0, 8], sizes = [8, 8], strides = [1, 1]} : vector<8x32xbf16> to vector<8x8xbf16>
    %91 = vector.extract_strided_slice %32 {offsets = [0, 16], sizes = [8, 8], strides = [1, 1]} : vector<8x32xbf16> to vector<8x8xbf16>
    %92 = vector.extract_strided_slice %32 {offsets = [0, 24], sizes = [8, 8], strides = [1, 1]} : vector<8x32xbf16> to vector<8x8xbf16>
    %93 = vector.shape_cast %89 : vector<8x8xbf16> to vector<1x8x8xbf16>
    %94 = vector.shape_cast %90 : vector<8x8xbf16> to vector<1x8x8xbf16>
    %95 = vector.shape_cast %91 : vector<8x8xbf16> to vector<1x8x8xbf16>
    %96 = vector.shape_cast %92 : vector<8x8xbf16> to vector<1x8x8xbf16>
    %97 = tpu.concatenate %93, %94, %95, %96 in 0 : vector<1x8x8xbf16>, vector<1x8x8xbf16>, vector<1x8x8xbf16>, vector<1x8x8xbf16> -> vector<4x8x8xbf16>
    "tpu.trace_start"() <{level = 10 : i32, message = "hqd,hkd->hqk"}> : () -> ()
    %cst_27 = arith.constant dense<0.000000e+00> : vector<4x8x8xf32>
    %98 = tpu.matmul %61, %88, %cst_27 {dimension_numbers = #tpu.dot_dimension_numbers<[2], [2], [1], [1], [0, 0, 0, 1, 1, 1], [0], [0]>} : vector<4x8x8xbf16>, vector<4x8x8xbf16>, vector<4x8x8xf32> -> vector<4x8x8xf32>
    "tpu.trace_stop"() : () -> ()
    %cst_28 = arith.constant dense<0xFF800000> : vector<4x8xf32>
    %99 = vector.multi_reduction <maximumf>, %98, %cst_28 [2] : vector<4x8x8xf32> to vector<4x8xf32>
    %100 = vector.shape_cast %99 : vector<4x8xf32> to vector<4x8x1xf32>
    %101 = vector.broadcast %100 : vector<4x8x1xf32> to vector<4x8x8xf32>
    %102 = arith.subf %98, %101 : vector<4x8x8xf32>
    %103 = math.exp %102 : vector<4x8x8xf32>
    %cst_29 = arith.constant dense<0.000000e+00> : vector<4x8xf32>
    %104 = vector.multi_reduction <add>, %103, %cst_29 [2] : vector<4x8x8xf32> to vector<4x8xf32>
    %105 = vector.shape_cast %104 : vector<4x8xf32> to vector<4x8x1xf32>
    %106 = tpu.reciprocal %105 {approx = true} : vector<4x8x1xf32> -> vector<4x8x1xf32>
    %107 = vector.broadcast %106 : vector<4x8x1xf32> to vector<4x8x8xf32>
    %108 = arith.mulf %103, %107 : vector<4x8x8xf32>
    %109 = arith.truncf %108 : vector<4x8x8xf32> to vector<4x8x8xbf16>
    "tpu.trace_start"() <{level = 10 : i32, message = "hqk,hkd->hqd"}> : () -> ()
    %cst_30 = arith.constant dense<0.000000e+00> : vector<4x8x8xf32>
    %110 = tpu.matmul %109, %97, %cst_30 {dimension_numbers = #tpu.dot_dimension_numbers<[2], [1], [1], [2], [0, 0, 0, 1, 1, 2], [0], [0]>} : vector<4x8x8xbf16>, vector<4x8x8xbf16>, vector<4x8x8xf32> -> vector<4x8x8xf32>
    "tpu.trace_stop"() : () -> ()
    %111 = vector.extract_strided_slice %110 {offsets = [0, 0, 0], sizes = [1, 8, 8], strides = [1, 1, 1]} : vector<4x8x8xf32> to vector<1x8x8xf32>
    %112 = vector.shape_cast %111 : vector<1x8x8xf32> to vector<8x8xf32>
    %113 = vector.extract_strided_slice %110 {offsets = [1, 0, 0], sizes = [1, 8, 8], strides = [1, 1, 1]} : vector<4x8x8xf32> to vector<1x8x8xf32>
    %114 = vector.shape_cast %113 : vector<1x8x8xf32> to vector<8x8xf32>
    %115 = vector.extract_strided_slice %110 {offsets = [2, 0, 0], sizes = [1, 8, 8], strides = [1, 1, 1]} : vector<4x8x8xf32> to vector<1x8x8xf32>
    %116 = vector.shape_cast %115 : vector<1x8x8xf32> to vector<8x8xf32>
    %117 = vector.extract_strided_slice %110 {offsets = [3, 0, 0], sizes = [1, 8, 8], strides = [1, 1, 1]} : vector<4x8x8xf32> to vector<1x8x8xf32>
    %118 = vector.shape_cast %117 : vector<1x8x8xf32> to vector<8x8xf32>
    %119 = tpu.concatenate %112, %114, %116, %118 in 1 : vector<8x8xf32>, vector<8x8xf32>, vector<8x8xf32>, vector<8x8xf32> -> vector<8x32xf32>
    %120 = arith.truncf %119 : vector<8x32xf32> to vector<8x32xbf16>
    %c0_31 = arith.constant 0 : index
    %c0_32 = arith.constant 0 : index
    %c0_33 = arith.constant 0 : index
    %121 = vector.load %arg8[%c0_31, %c0_32, %c0_33] : memref<1x32x32xbf16, #tpu.memory_space<vmem>>, vector<1x32x32xbf16>
    %122 = vector.shape_cast %121 : vector<1x32x32xbf16> to vector<32x32xbf16>
    %cst_34 = arith.constant dense<0.000000e+00> : vector<8x32xf32>
    %123 = tpu.matmul %120, %122, %cst_34 {dimension_numbers = #tpu.dot_dimension_numbers<[1], [0], [0], [1], [0, 0, 1, 1], [], []>} : vector<8x32xbf16>, vector<32x32xbf16>, vector<8x32xf32> -> vector<8x32xf32>
    %124 = arith.addf %4, %123 : vector<8x32xf32>
    %c0_35 = arith.constant 0 : index
    %c0_36 = arith.constant 0 : index
    %c0_37 = arith.constant 0 : index
    %125 = vector.load %arg9[%c0_35, %c0_36, %c0_37] : memref<1x1x32xf32, #tpu.memory_space<vmem>>, vector<1x1x32xf32>
    %126 = vector.shape_cast %125 : vector<1x1x32xf32> to vector<1x32xf32>
    %127 = arith.mulf %124, %124 : vector<8x32xf32>
    %cst_38 = arith.constant dense<0.000000e+00> : vector<8xf32>
    %128 = vector.multi_reduction <add>, %127, %cst_38 [1] : vector<8x32xf32> to vector<8xf32>
    %129 = vector.shape_cast %128 : vector<8xf32> to vector<8x1xf32>
    %cst_39 = arith.constant 3.200000e+01 : f32
    %130 = vector.broadcast %cst_39 : f32 to vector<8x1xf32>
    %131 = arith.divf %129, %130 : vector<8x1xf32>
    %cst_40 = arith.constant 9.99999974E-6 : f32
    %132 = vector.broadcast %cst_40 : f32 to vector<8x1xf32>
    %133 = arith.addf %131, %132 : vector<8x1xf32>
    %134 = math.rsqrt %133 : vector<8x1xf32>
    %135 = vector.broadcast %134 : vector<8x1xf32> to vector<8x32xf32>
    %136 = arith.mulf %124, %135 : vector<8x32xf32>
    %137 = vector.broadcast %126 : vector<1x32xf32> to vector<8x32xf32>
    %138 = arith.mulf %136, %137 : vector<8x32xf32>
    %139 = arith.truncf %138 : vector<8x32xf32> to vector<8x32xbf16>
    %c0_41 = arith.constant 0 : index
    %c0_42 = arith.constant 0 : index
    %c0_43 = arith.constant 0 : index
    %140 = vector.load %arg10[%c0_41, %c0_42, %c0_43] : memref<1x32x96xbf16, #tpu.memory_space<vmem>>, vector<1x32x96xbf16>
    %141 = vector.shape_cast %140 : vector<1x32x96xbf16> to vector<32x96xbf16>
    %cst_44 = arith.constant dense<0.000000e+00> : vector<8x96xf32>
    %142 = tpu.matmul %139, %141, %cst_44 {dimension_numbers = #tpu.dot_dimension_numbers<[1], [0], [0], [1], [0, 0, 1, 1], [], []>} : vector<8x32xbf16>, vector<32x96xbf16>, vector<8x96xf32> -> vector<8x96xf32>
    %c0_45 = arith.constant 0 : index
    %c0_46 = arith.constant 0 : index
    %c0_47 = arith.constant 0 : index
    %143 = vector.load %arg11[%c0_45, %c0_46, %c0_47] : memref<1x32x96xbf16, #tpu.memory_space<vmem>>, vector<1x32x96xbf16>
    %144 = vector.shape_cast %143 : vector<1x32x96xbf16> to vector<32x96xbf16>
    %cst_48 = arith.constant dense<0.000000e+00> : vector<8x96xf32>
    %145 = tpu.matmul %139, %144, %cst_48 {dimension_numbers = #tpu.dot_dimension_numbers<[1], [0], [0], [1], [0, 0, 1, 1], [], []>} : vector<8x32xbf16>, vector<32x96xbf16>, vector<8x96xf32> -> vector<8x96xf32>
    %146 = arith.negf %142 : vector<8x96xf32>
    %147 = math.exp %146 : vector<8x96xf32>
    %cst_49 = arith.constant 1.000000e+00 : f32
    %148 = vector.broadcast %cst_49 : f32 to vector<8x96xf32>
    %149 = arith.addf %148, %147 : vector<8x96xf32>
    %150 = arith.divf %148, %149 : vector<8x96xf32>
    %151 = arith.mulf %142, %150 : vector<8x96xf32>
    %152 = arith.mulf %151, %145 : vector<8x96xf32>
    %153 = arith.truncf %152 : vector<8x96xf32> to vector<8x96xbf16>
    %c0_50 = arith.constant 0 : index
    %c0_51 = arith.constant 0 : index
    %c0_52 = arith.constant 0 : index
    %154 = vector.load %arg12[%c0_50, %c0_51, %c0_52] : memref<1x96x32xbf16, #tpu.memory_space<vmem>>, vector<1x96x32xbf16>
    %155 = vector.shape_cast %154 : vector<1x96x32xbf16> to vector<96x32xbf16>
    %cst_53 = arith.constant dense<0.000000e+00> : vector<8x32xf32>
    %156 = tpu.matmul %153, %155, %cst_53 {dimension_numbers = #tpu.dot_dimension_numbers<[1], [0], [0], [1], [0, 0, 1, 1], [], []>} : vector<8x96xbf16>, vector<96x32xbf16>, vector<8x32xf32> -> vector<8x32xf32>
    %157 = arith.addf %124, %156 : vector<8x32xf32>
    %c0_54 = arith.constant 0 : index
    %c0_55 = arith.constant 0 : index
    %c0_56 = arith.constant 0 : index
    %158 = vector.load %arg16[%c0_54, %c0_55, %c0_56] : memref<1x8x32xf32, #tpu.memory_space<vmem>>, vector<1x8x32xf32>
    %159 = vector.shape_cast %158 : vector<1x8x32xf32> to vector<8x32xf32>
    %160 = vector.shape_cast %157 : vector<8x32xf32> to vector<1x8x32xf32>
    tpu.vector_store %arg16[%c0_54, %c0_55, %c0_56], %160 {strides = array<i32>} : memref<1x8x32xf32, #tpu.memory_space<vmem>>, vector<1x8x32xf32>,
    return
  }
  func.func @transform_0(%arg0: i32, %arg1: i32, %arg2: memref<3xi32, #tpu.memory_space<smem>>) -> (i32, i32, i32) {
    %c0_i32 = arith.constant 0 : i32
    %c0_i32_0 = arith.constant 0 : i32
    %c0_i32_1 = arith.constant 0 : i32
    return %arg0, %c0_i32, %c0_i32_0 : i32, i32, i32
  }
  func.func @transform_1(%arg0: i32, %arg1: i32, %arg2: memref<3xi32, #tpu.memory_space<smem>>) -> (i32, i32, i32) {
    %0 = arith.index_cast %arg1 : i32 to index
    %1 = memref.load %arg2[%0] : memref<3xi32, #tpu.memory_space<smem>>
    %c0_i32 = arith.constant 0 : i32
    %c0_i32_0 = arith.constant 0 : i32
    %c0_i32_1 = arith.constant 0 : i32
    return %1, %c0_i32, %c0_i32_0 : i32, i32, i32
  }
  func.func @transform_2(%arg0: i32, %arg1: i32, %arg2: memref<3xi32, #tpu.memory_space<smem>>) -> (i32, i32, i32) {
    %0 = arith.index_cast %arg1 : i32 to index
    %1 = memref.load %arg2[%0] : memref<3xi32, #tpu.memory_space<smem>>
    %c0_i32 = arith.constant 0 : i32
    %c0_i32_0 = arith.constant 0 : i32
    %c0_i32_1 = arith.constant 0 : i32
    return %1, %c0_i32, %c0_i32_0 : i32, i32, i32
  }
  func.func @transform_3(%arg0: i32, %arg1: i32, %arg2: memref<3xi32, #tpu.memory_space<smem>>) -> (i32, i32, i32) {
    %0 = arith.index_cast %arg1 : i32 to index
    %1 = memref.load %arg2[%0] : memref<3xi32, #tpu.memory_space<smem>>
    %c0_i32 = arith.constant 0 : i32
    %c0_i32_0 = arith.constant 0 : i32
    %c0_i32_1 = arith.constant 0 : i32
    return %1, %c0_i32, %c0_i32_0 : i32, i32, i32
  }
  func.func @transform_4(%arg0: i32, %arg1: i32, %arg2: memref<3xi32, #tpu.memory_space<smem>>) -> (i32, i32, i32) {
    %0 = arith.index_cast %arg1 : i32 to index
    %1 = memref.load %arg2[%0] : memref<3xi32, #tpu.memory_space<smem>>
    %c0_i32 = arith.constant 0 : i32
    %c0_i32_0 = arith.constant 0 : i32
    %c0_i32_1 = arith.constant 0 : i32
    return %1, %c0_i32, %c0_i32_0 : i32, i32, i32
  }
  func.func @transform_5(%arg0: i32, %arg1: i32, %arg2: memref<3xi32, #tpu.memory_space<smem>>) -> (i32, i32, i32) {
    %0 = arith.index_cast %arg1 : i32 to index
    %1 = memref.load %arg2[%0] : memref<3xi32, #tpu.memory_space<smem>>
    %c0_i32 = arith.constant 0 : i32
    %c0_i32_0 = arith.constant 0 : i32
    %c0_i32_1 = arith.constant 0 : i32
    return %1, %c0_i32, %c0_i32_0 : i32, i32, i32
  }
  func.func @transform_6(%arg0: i32, %arg1: i32, %arg2: memref<3xi32, #tpu.memory_space<smem>>) -> (i32, i32, i32) {
    %0 = arith.index_cast %arg1 : i32 to index
    %1 = memref.load %arg2[%0] : memref<3xi32, #tpu.memory_space<smem>>
    %c0_i32 = arith.constant 0 : i32
    %c0_i32_0 = arith.constant 0 : i32
    %c0_i32_1 = arith.constant 0 : i32
    return %1, %c0_i32, %c0_i32_0 : i32, i32, i32
  }
  func.func @transform_7(%arg0: i32, %arg1: i32, %arg2: memref<3xi32, #tpu.memory_space<smem>>) -> (i32, i32, i32) {
    %0 = arith.index_cast %arg1 : i32 to index
    %1 = memref.load %arg2[%0] : memref<3xi32, #tpu.memory_space<smem>>
    %c0_i32 = arith.constant 0 : i32
    %c0_i32_0 = arith.constant 0 : i32
    %c0_i32_1 = arith.constant 0 : i32
    return %1, %c0_i32, %c0_i32_0 : i32, i32, i32
  }
  func.func @transform_8(%arg0: i32, %arg1: i32, %arg2: memref<3xi32, #tpu.memory_space<smem>>) -> (i32, i32, i32) {
    %0 = arith.index_cast %arg1 : i32 to index
    %1 = memref.load %arg2[%0] : memref<3xi32, #tpu.memory_space<smem>>
    %c0_i32 = arith.constant 0 : i32
    %c0_i32_0 = arith.constant 0 : i32
    %c0_i32_1 = arith.constant 0 : i32
    return %1, %c0_i32, %c0_i32_0 : i32, i32, i32
  }
  func.func @transform_9(%arg0: i32, %arg1: i32, %arg2: memref<3xi32, #tpu.memory_space<smem>>) -> (i32, i32, i32) {
    %0 = arith.index_cast %arg1 : i32 to index
    %1 = memref.load %arg2[%0] : memref<3xi32, #tpu.memory_space<smem>>
    %c0_i32 = arith.constant 0 : i32
    %c0_i32_0 = arith.constant 0 : i32
    %c0_i32_1 = arith.constant 0 : i32
    return %1, %c0_i32, %c0_i32_0 : i32, i32, i32
  }
  func.func @transform_10(%arg0: i32, %arg1: i32, %arg2: memref<3xi32, #tpu.memory_space<smem>>) -> (i32, i32) {
    %c0_i32 = arith.constant 0 : i32
    %c0_i32_0 = arith.constant 0 : i32
    %c0_i32_1 = arith.constant 0 : i32
    return %c0_i32, %c0_i32_0 : i32, i32
  }
  func.func @transform_11(%arg0: i32, %arg1: i32, %arg2: memref<3xi32, #tpu.memory_space<smem>>) -> (i32, i32) {
    %c0_i32 = arith.constant 0 : i32
    %c0_i32_0 = arith.constant 0 : i32
    %c0_i32_1 = arith.constant 0 : i32
    return %c0_i32, %c0_i32_0 : i32, i32
  }
  func.func @transform_12(%arg0: i32, %arg1: i32, %arg2: memref<3xi32, #tpu.memory_space<smem>>) -> (i32, i32) {
    %c0_i32 = arith.constant 0 : i32
    %c0_i32_0 = arith.constant 0 : i32
    %c0_i32_1 = arith.constant 0 : i32
    return %c0_i32, %c0_i32_0 : i32, i32
  }
  func.func @transform_13(%arg0: i32, %arg1: i32, %arg2: memref<3xi32, #tpu.memory_space<smem>>) -> (i32, i32, i32) {
    %c0_i32 = arith.constant 0 : i32
    %c0_i32_0 = arith.constant 0 : i32
    %c0_i32_1 = arith.constant 0 : i32
    return %arg0, %c0_i32, %c0_i32_0 : i32, i32, i32
  }
}

</mosaic_0001>

<llo_original>
// kernel: tpu_custom_call.1
$region0: #{tpu_custom_call.1}
  #allocation0 [shape = 'u32[]', space=smem, size = 0x4, offset = 0x4, fixed_abs, tag = 'smem constant byte address 0x4 - core index']
  #allocation1 [shape = 'u32[144,128]{1,0:T(1,128)}', space=vmem, size = 0x12000, scoped, tag = 'internal scratch']
  #allocation2 [shape = 's32[1]{0}', space=sflag, size = 0x4, scoped, tag = 'scoped memory for tpu_custom_call.1']
  #allocation3 [shape = 'u8[512]{0}', space=smem, size = 0x200, scoped, tag = 'prefetched SMEM operand 0']
  %s0 = inlined_call_operand.hbm [shape: s32[3], index: 0, kind: input, shape index: {}]
  %s1 = inlined_call_operand.hbm [shape: f32[2,8,32], index: 1, kind: input, shape index: {}, may-alias: {1,14}]
  %s2 = inlined_call_operand.hbm [shape: f32[3,1,32], index: 2, kind: input, shape index: {}]
  %s3 = inlined_call_operand.hbm [shape: bf16[3,32,32], index: 3, kind: input, shape index: {}]
  %s4 = inlined_call_operand.hbm [shape: bf16[3,32,32], index: 4, kind: input, shape index: {}]
  %s5 = inlined_call_operand.hbm [shape: bf16[3,32,32], index: 5, kind: input, shape index: {}]
  %s6 = inlined_call_operand.hbm [shape: bf16[3,32,32], index: 6, kind: input, shape index: {}]
  %s7 = inlined_call_operand.hbm [shape: f32[3,1,32], index: 7, kind: input, shape index: {}]
  %s8 = inlined_call_operand.hbm [shape: bf16[3,32,96], index: 8, kind: input, shape index: {}]
  %s9 = inlined_call_operand.hbm [shape: bf16[3,32,96], index: 9, kind: input, shape index: {}]
  %s10 = inlined_call_operand.hbm [shape: bf16[3,96,32], index: 10, kind: input, shape index: {}]
  %s11 = inlined_call_operand.hbm [shape: f32[8,8], index: 11, kind: input, shape index: {}]
  %s12 = inlined_call_operand.hbm [shape: f32[8,8], index: 12, kind: input, shape index: {}]
  %s13 = inlined_call_operand.hbm [shape: f32[8,8], index: 13, kind: input, shape index: {}]
  %s14 = inlined_call_operand.hbm [shape: f32[2,8,32], index: 14, kind: output, shape index: {}, may-alias: {1,14}]
  %s15 = sld [smem:[#allocation0]]
  $region141: #{tpu_custom_call.1} parent=0
    _
  %s17 = ssub.s32 1, %s15
  %s18 = scalar_select 0, %s17, %s15
  %20 = dma.hbm_to_smem %s0, 16, [#allocation3], [#allocation2]
  %21 = dma.done [#allocation2], 16
  %22 = sfence
  $region1: #{tpu_custom_call.1} parent=0
    #allocation4 [shape = 'u8[8192]{0}', space=vmem, size = 0x2000, scoped, tag = 'input window, operand 1']
    #allocation5 [shape = 's32[2]{0}', space=sflag, size = 0x8, scoped, tag = 'scoped memory for tpu_custom_call.1']
    #allocation6 [shape = 's32[2]{0}', space=sflag, size = 0x8, scoped, tag = 'scoped memory for tpu_custom_call.1']
    #allocation7 [shape = 'u8[1024]{0}', space=vmem, size = 0x400, scoped, tag = 'input window, operand 2']
    #allocation8 [shape = 's32[2]{0}', space=sflag, size = 0x8, scoped, tag = 'scoped memory for tpu_custom_call.1']
    #allocation9 [shape = 'u8[16384]{0}', space=vmem, size = 0x4000, scoped, tag = 'input window, operand 3']
    #allocation10 [shape = 'u8[16384]{0}', space=vmem, size = 0x4000, scoped, tag = 'input window, operand 4']
    #allocation11 [shape = 's32[2]{0}', space=sflag, size = 0x8, scoped, tag = 'scoped memory for tpu_custom_call.1']
    #allocation12 [shape = 'u8[16384]{0}', space=vmem, size = 0x4000, scoped, tag = 'input window, operand 5']
    #allocation13 [shape = 'u8[16384]{0}', space=vmem, size = 0x4000, scoped, tag = 'input window, operand 6']
    #allocation14 [shape = 's32[2]{0}', space=sflag, size = 0x8, scoped, tag = 'scoped memory for tpu_custom_call.1']
    #allocation15 [shape = 'u8[1024]{0}', space=vmem, size = 0x400, scoped, tag = 'input window, operand 7']
    #allocation16 [shape = 'u8[16384]{0}', space=vmem, size = 0x4000, scoped, tag = 'input window, operand 8']
    #allocation17 [shape = 's32[2]{0}', space=sflag, size = 0x8, scoped, tag = 'scoped memory for tpu_custom_call.1']
    #allocation18 [shape = 'u8[16384]{0}', space=vmem, size = 0x4000, scoped, tag = 'input window, operand 9']
    #allocation19 [shape = 'u8[49152]{0}', space=vmem, size = 0xc000, scoped, tag = 'input window, operand 10']
    #allocation20 [shape = 's32[2]{0}', space=sflag, size = 0x8, scoped, tag = 'scoped memory for tpu_custom_call.1']
    #allocation21 [shape = 'u8[4096]{0}', space=vmem, size = 0x1000, scoped, tag = 'input window, operand 11, single buffered']
    #allocation22 [shape = 'u8[4096]{0}', space=vmem, size = 0x1000, scoped, tag = 'input window, operand 12, single buffered']
    #allocation23 [shape = 's32[1]{0}', space=sflag, size = 0x4, scoped, tag = 'scoped memory for tpu_custom_call.1']
    #allocation24 [shape = 'u8[4096]{0}', space=vmem, size = 0x1000, scoped, tag = 'input window, operand 13, single buffered']
    #allocation25 [shape = 'u8[8192]{0}', space=vmem, size = 0x2000, scoped, tag = 'output window, operand 0']
    %23 = vsyncpa [#allocation5], 0
    %s24 = scalar_lea.sflag [#allocation5], 1
    %25 = vsyncpa %s24, 0
    %26 = vsyncpa [#allocation8], 0
    %s27 = scalar_lea.sflag [#allocation8], 1
    %28 = vsyncpa %s27, 0
    %29 = vsyncpa [#allocation11], 0
    %s30 = scalar_lea.sflag [#allocation11], 1
    %31 = vsyncpa %s30, 0
    %32 = vsyncpa [#allocation14], 0
    %s33 = scalar_lea.sflag [#allocation14], 1
    %34 = vsyncpa %s33, 0
    %35 = vsyncpa [#allocation17], 0
    %s36 = scalar_lea.sflag [#allocation17], 1
    %37 = vsyncpa %s36, 0
    %38 = vsyncpa [#allocation20], 0
    %s39 = scalar_lea.sflag [#allocation20], 1
    %40 = vsyncpa %s39, 0
    %41 = vsyncpa [#allocation23], 0
    %42 = vsyncpa [#allocation6], 0
    %s43 = scalar_lea.sflag [#allocation6], 1
    %44 = vsyncpa %s43, 0
    loop: start=0, step=1, limit=8
    $region2: #{tpu_custom_call.1} parent=1 // loop_pre_header
      _
    $region3: #{tpu_custom_call.1} parent=1 // loop_header
      %s46 = sphi 0, %s50
      %p47 = scmp.ge.s32.totalorder %s46, 8
      %s53 = sphi 0, %s65
      %s54 = sphi 0, %s61
      %s55 = sphi 0, %s53
      %s56 = sphi 0, %s54
      %s57 = sphi 0, %s55
      %s58 = sphi 0, %s56
      %s68 = sphi 0, %s70
      %s71 = sphi 0, %s68
      %s72 = sphi 0, %s71
      %s88 = sphi 0, %s72
      %s96 = sphi 0, %s98
      %s99 = sphi 0, %s96
      %s100 = sphi 0, %s99
      %s116 = sphi 0, %s100
      %s124 = sphi 0, %s126
      %s127 = sphi 0, %s124
      %s128 = sphi 0, %s127
      %s144 = sphi 0, %s128
      %s152 = sphi 0, %s154
      %s155 = sphi 0, %s152
      %s156 = sphi 0, %s155
      %s172 = sphi 0, %s156
      %s180 = sphi 0, %s182
      %s183 = sphi 0, %s180
      %s184 = sphi 0, %s183
      %s200 = sphi 0, %s184
      %s208 = sphi 0, %s210
      %s211 = sphi 0, %s208
      %s212 = sphi 0, %s211
      %s228 = sphi 0, %s212
      %s236 = sphi 0, %s238
      %s239 = sphi 0, %s236
      %s240 = sphi 0, %s239
      %s256 = sphi 0, %s240
      %s264 = sphi 0, %s266
      %s267 = sphi 0, %s264
      %s268 = sphi 0, %s267
      %s284 = sphi 0, %s268
      %s292 = sphi 0, %s294
      %s295 = sphi 0, %s292
      %s296 = sphi 0, %s295
      %s312 = sphi 0, %s296
      %s320 = sphi 0, %s322
      %s323 = sphi 0, %s320
      %s324 = sphi 0, %s323
      %s340 = sphi 0, %s324
      %s344 = sphi 0, %s344
      %s346 = sphi 0, %s344
      %s347 = sphi 0, %s346
      %s361 = sphi 0, %s347
      %s365 = sphi 0, %s365
      %s367 = sphi 0, %s365
      %s368 = sphi 0, %s367
      %s382 = sphi 0, %s368
      %s386 = sphi 0, %s386
      %s388 = sphi 0, %s386
      %s389 = sphi 0, %s388
      %s403 = sphi 0, %s389
      %s409 = sphi 0, %s411
      %s412 = sphi 0, %s409
      %s413 = sphi 0, %s412
      %s429 = sphi 0, %s413
    $region4: #{tpu_custom_call.1} parent=1 // loop_header_branch
      %49 = sbr.rel (%p47) target = $region8
    $region5: #{tpu_custom_call.1} parent=1 // loop_body
      %s51 = ssub.s32 %s46, 1
      %s52 = ssub.s32 %s46, 2
      %s59 = sadd.s32 1, %s54
      %p60 = scmp.ge.s32.totalorder %s59, 3
      %s61 = scalar_select %p60, 0, %s59
      %s62 = sadd.s32 1, %s53
      %s63 = scalar_select %p60, %s62, %s53
      %p64 = scmp.ge.s32.totalorder %s63, 2
      %s65 = scalar_select %p64, 0, %s63
      %s66 = ssub.s32 %s53, %s65
      %p67 = scmp.eq.s32.totalorder %s66, 0
      %s69 = sadd.s32 %s68, 1
      %s70 = scalar_select %p67, %s68, %s69
      %p73 = pneg %p67
      %p74 = scmp.eq.s32.totalorder %s46, 5
      %p75 = por %p73, %p74
      %p76 = scmp.ne.s32.totalorder %s68, %s71
      %p77 = scmp.eq.s32.totalorder %s46, 0
      %p78 = por %p76, %p77
      %p79 = scmp.ne.s32.totalorder %s68, %s71
      %p80 = scmp.eq.s32.totalorder %s51, 5
      %p81 = por %p79, %p80
      %p82 = scmp.ne.s32.totalorder %s71, %s72
      %p83 = scmp.eq.s32.totalorder %s51, 0
      %p84 = por %p82, %p83
      %p85 = scmp.ne.s32.totalorder %s71, %s72
      %p86 = scmp.eq.s32.totalorder %s52, 5
      %p87 = por %p85, %p86
      %p89 = scmp.ne.s32.totalorder %s72, %s88
      %p90 = scmp.eq.s32.totalorder %s52, 0
      %p91 = por %p89, %p90
      %s92 = sld [smem:[#allocation3 + %s54]]
      %s93 = sld [smem:[#allocation3 + %s61]]
      %s94 = ssub.s32 %s92, %s93
      %p95 = scmp.eq.s32.totalorder %s94, 0
      %s97 = sadd.s32 %s96, 1
      %s98 = scalar_select %p95, %s96, %s97
      %p101 = pneg %p95
      %p102 = scmp.eq.s32.totalorder %s46, 5
      %p103 = por %p101, %p102
      %p104 = scmp.ne.s32.totalorder %s96, %s99
      %p105 = scmp.eq.s32.totalorder %s46, 0
      %p106 = por %p104, %p105
      %p107 = scmp.ne.s32.totalorder %s96, %s99
      %p108 = scmp.eq.s32.totalorder %s51, 5
      %p109 = por %p107, %p108
      %p110 = scmp.ne.s32.totalorder %s99, %s100
      %p111 = scmp.eq.s32.totalorder %s51, 0
      %p112 = por %p110, %p111
      %p113 = scmp.ne.s32.totalorder %s99, %s100
      %p114 = scmp.eq.s32.totalorder %s52, 5
      %p115 = por %p113, %p114
      %p117 = scmp.ne.s32.totalorder %s100, %s116
      %p118 = scmp.eq.s32.totalorder %s52, 0
      %p119 = por %p117, %p118
      %s120 = sld [smem:[#allocation3 + %s54]]
      %s121 = sld [smem:[#allocation3 + %s61]]
      %s122 = ssub.s32 %s120, %s121
      %p123 = scmp.eq.s32.totalorder %s122, 0
      %s125 = sadd.s32 %s124, 1
      %s126 = scalar_select %p123, %s124, %s125
      %p129 = pneg %p123
      %p130 = scmp.eq.s32.totalorder %s46, 5
      %p131 = por %p129, %p130
      %p132 = scmp.ne.s32.totalorder %s124, %s127
      %p133 = scmp.eq.s32.totalorder %s46, 0
      %p134 = por %p132, %p133
      %p135 = scmp.ne.s32.totalorder %s124, %s127
      %p136 = scmp.eq.s32.totalorder %s51, 5
      %p137 = por %p135, %p136
      %p138 = scmp.ne.s32.totalorder %s127, %s128
      %p139 = scmp.eq.s32.totalorder %s51, 0
      %p140 = por %p138, %p139
      %p141 = scmp.ne.s32.totalorder %s127, %s128
      %p142 = scmp.eq.s32.totalorder %s52, 5
      %p143 = por %p141, %p142
      %p145 = scmp.ne.s32.totalorder %s128, %s144
      %p146 = scmp.eq.s32.totalorder %s52, 0
      %p147 = por %p145, %p146
      %s148 = sld [smem:[#allocation3 + %s54]]
      %s149 = sld [smem:[#allocation3 + %s61]]
      %s150 = ssub.s32 %s148, %s149
      %p151 = scmp.eq.s32.totalorder %s150, 0
      %s153 = sadd.s32 %s152, 1
      %s154 = scalar_select %p151, %s152, %s153
      %p157 = pneg %p151
      %p158 = scmp.eq.s32.totalorder %s46, 5
      %p159 = por %p157, %p158
      %p160 = scmp.ne.s32.totalorder %s152, %s155
      %p161 = scmp.eq.s32.totalorder %s46, 0
      %p162 = por %p160, %p161
      %p163 = scmp.ne.s32.totalorder %s152, %s155
      %p164 = scmp.eq.s32.totalorder %s51, 5
      %p165 = por %p163, %p164
      %p166 = scmp.ne.s32.totalorder %s155, %s156
      %p167 = scmp.eq.s32.totalorder %s51, 0
      %p168 = por %p166, %p167
      %p169 = scmp.ne.s32.totalorder %s155, %s156
      %p170 = scmp.eq.s32.totalorder %s52, 5
      %p171 = por %p169, %p170
      %p173 = scmp.ne.s32.totalorder %s156, %s172
      %p174 = scmp.eq.s32.totalorder %s52, 0
      %p175 = por %p173, %p174
      %s176 = sld [smem:[#allocation3 + %s54]]
      %s177 = sld [smem:[#allocation3 + %s61]]
      %s178 = ssub.s32 %s176, %s177
      %p179 = scmp.eq.s32.totalorder %s178, 0
      %s181 = sadd.s32 %s180, 1
      %s182 = scalar_select %p179, %s180, %s181
      %p185 = pneg %p179
      %p186 = scmp.eq.s32.totalorder %s46, 5
      %p187 = por %p185, %p186
      %p188 = scmp.ne.s32.totalorder %s180, %s183
      %p189 = scmp.eq.s32.totalorder %s46, 0
      %p190 = por %p188, %p189
      %p191 = scmp.ne.s32.totalorder %s180, %s183
      %p192 = scmp.eq.s32.totalorder %s51, 5
      %p193 = por %p191, %p192
      %p194 = scmp.ne.s32.totalorder %s183, %s184
      %p195 = scmp.eq.s32.totalorder %s51, 0
      %p196 = por %p194, %p195
      %p197 = scmp.ne.s32.totalorder %s183, %s184
      %p198 = scmp.eq.s32.totalorder %s52, 5
      %p199 = por %p197, %p198
      %p201 = scmp.ne.s32.totalorder %s184, %s200
      %p202 = scmp.eq.s32.totalorder %s52, 0
      %p203 = por %p201, %p202
      %s204 = sld [smem:[#allocation3 + %s54]]
      %s205 = sld [smem:[#allocation3 + %s61]]
      %s206 = ssub.s32 %s204, %s205
      %p207 = scmp.eq.s32.totalorder %s206, 0
      %s209 = sadd.s32 %s208, 1
      %s210 = scalar_select %p207, %s208, %s209
      %p213 = pneg %p207
      %p214 = scmp.eq.s32.totalorder %s46, 5
      %p215 = por %p213, %p214
      %p216 = scmp.ne.s32.totalorder %s208, %s211
      %p217 = scmp.eq.s32.totalorder %s46, 0
      %p218 = por %p216, %p217
      %p219 = scmp.ne.s32.totalorder %s208, %s211
      %p220 = scmp.eq.s32.totalorder %s51, 5
      %p221 = por %p219, %p220
      %p222 = scmp.ne.s32.totalorder %s211, %s212
      %p223 = scmp.eq.s32.totalorder %s51, 0
      %p224 = por %p222, %p223
      %p225 = scmp.ne.s32.totalorder %s211, %s212
      %p226 = scmp.eq.s32.totalorder %s52, 5
      %p227 = por %p225, %p226
      %p229 = scmp.ne.s32.totalorder %s212, %s228
      %p230 = scmp.eq.s32.totalorder %s52, 0
      %p231 = por %p229, %p230
      %s232 = sld [smem:[#allocation3 + %s54]]
      %s233 = sld [smem:[#allocation3 + %s61]]
      %s234 = ssub.s32 %s232, %s233
      %p235 = scmp.eq.s32.totalorder %s234, 0
      %s237 = sadd.s32 %s236, 1
      %s238 = scalar_select %p235, %s236, %s237
      %p241 = pneg %p235
      %p242 = scmp.eq.s32.totalorder %s46, 5
      %p243 = por %p241, %p242
      %p244 = scmp.ne.s32.totalorder %s236, %s239
      %p245 = scmp.eq.s32.totalorder %s46, 0
      %p246 = por %p244, %p245
      %p247 = scmp.ne.s32.totalorder %s236, %s239
      %p248 = scmp.eq.s32.totalorder %s51, 5
      %p249 = por %p247, %p248
      %p250 = scmp.ne.s32.totalorder %s239, %s240
      %p251 = scmp.eq.s32.totalorder %s51, 0
      %p252 = por %p250, %p251
      %p253 = scmp.ne.s32.totalorder %s239, %s240
      %p254 = scmp.eq.s32.totalorder %s52, 5
      %p255 = por %p253, %p254
      %p257 = scmp.ne.s32.totalorder %s240, %s256
      %p258 = scmp.eq.s32.totalorder %s52, 0
      %p259 = por %p257, %p258
      %s260 = sld [smem:[#allocation3 + %s54]]
      %s261 = sld [smem:[#allocation3 + %s61]]
      %s262 = ssub.s32 %s260, %s261
      %p263 = scmp.eq.s32.totalorder %s262, 0
      %s265 = sadd.s32 %s264, 1
      %s266 = scalar_select %p263, %s264, %s265
      %p269 = pneg %p263
      %p270 = scmp.eq.s32.totalorder %s46, 5
      %p271 = por %p269, %p270
      %p272 = scmp.ne.s32.totalorder %s264, %s267
      %p273 = scmp.eq.s32.totalorder %s46, 0
      %p274 = por %p272, %p273
      %p275 = scmp.ne.s32.totalorder %s264, %s267
      %p276 = scmp.eq.s32.totalorder %s51, 5
      %p277 = por %p275, %p276
      %p278 = scmp.ne.s32.totalorder %s267, %s268
      %p279 = scmp.eq.s32.totalorder %s51, 0
      %p280 = por %p278, %p279
      %p281 = scmp.ne.s32.totalorder %s267, %s268
      %p282 = scmp.eq.s32.totalorder %s52, 5
      %p283 = por %p281, %p282
      %p285 = scmp.ne.s32.totalorder %s268, %s284
      %p286 = scmp.eq.s32.totalorder %s52, 0
      %p287 = por %p285, %p286
      %s288 = sld [smem:[#allocation3 + %s54]]
      %s289 = sld [smem:[#allocation3 + %s61]]
      %s290 = ssub.s32 %s288, %s289
      %p291 = scmp.eq.s32.totalorder %s290, 0
      %s293 = sadd.s32 %s292, 1
      %s294 = scalar_select %p291, %s292, %s293
      %p297 = pneg %p291
      %p298 = scmp.eq.s32.totalorder %s46, 5
      %p299 = por %p297, %p298
      %p300 = scmp.ne.s32.totalorder %s292, %s295
      %p301 = scmp.eq.s32.totalorder %s46, 0
      %p302 = por %p300, %p301
      %p303 = scmp.ne.s32.totalorder %s292, %s295
      %p304 = scmp.eq.s32.totalorder %s51, 5
      %p305 = por %p303, %p304
      %p306 = scmp.ne.s32.totalorder %s295, %s296
      %p307 = scmp.eq.s32.totalorder %s51, 0
      %p308 = por %p306, %p307
      %p309 = scmp.ne.s32.totalorder %s295, %s296
      %p310 = scmp.eq.s32.totalorder %s52, 5
      %p311 = por %p309, %p310
      %p313 = scmp.ne.s32.totalorder %s296, %s312
      %p314 = scmp.eq.s32.totalorder %s52, 0
      %p315 = por %p313, %p314
      %s316 = sld [smem:[#allocation3 + %s54]]
      %s317 = sld [smem:[#allocation3 + %s61]]
      %s318 = ssub.s32 %s316, %s317
      %p319 = scmp.eq.s32.totalorder %s318, 0
      %s321 = sadd.s32 %s320, 1
      %s322 = scalar_select %p319, %s320, %s321
      %p325 = pneg %p319
      %p326 = scmp.eq.s32.totalorder %s46, 5
      %p327 = por %p325, %p326
      %p328 = scmp.ne.s32.totalorder %s320, %s323
      %p329 = scmp.eq.s32.totalorder %s46, 0
      %p330 = por %p328, %p329
      %p331 = scmp.ne.s32.totalorder %s320, %s323
      %p332 = scmp.eq.s32.totalorder %s51, 5
      %p333 = por %p331, %p332
      %p334 = scmp.ne.s32.totalorder %s323, %s324
      %p335 = scmp.eq.s32.totalorder %s51, 0
      %p336 = por %p334, %p335
      %p337 = scmp.ne.s32.totalorder %s323, %s324
      %p338 = scmp.eq.s32.totalorder %s52, 5
      %p339 = por %p337, %p338
      %p341 = scmp.ne.s32.totalorder %s324, %s340
      %p342 = scmp.eq.s32.totalorder %s52, 0
      %p343 = por %p341, %p342
      %s345 = sadd.s32 %s344, 1
      %p348 = scmp.eq.s32.totalorder %s46, 5
      %p349 = scmp.ne.s32.totalorder %s344, %s346
      %p350 = scmp.eq.s32.totalorder %s46, 0
      %p351 = por %p349, %p350
      %p352 = scmp.ne.s32.totalorder %s344, %s346
      %p353 = scmp.eq.s32.totalorder %s51, 5
      %p354 = por %p352, %p353
      %p355 = scmp.ne.s32.totalorder %s346, %s347
      %p356 = scmp.eq.s32.totalorder %s51, 0
      %p357 = por %p355, %p356
      %p358 = scmp.ne.s32.totalorder %s346, %s347
      %p359 = scmp.eq.s32.totalorder %s52, 5
      %p360 = por %p358, %p359
      %p362 = scmp.ne.s32.totalorder %s347, %s361
      %p363 = scmp.eq.s32.totalorder %s52, 0
      %p364 = por %p362, %p363
      %s366 = sadd.s32 %s365, 1
      %p369 = scmp.eq.s32.totalorder %s46, 5
      %p370 = scmp.ne.s32.totalorder %s365, %s367
      %p371 = scmp.eq.s32.totalorder %s46, 0
      %p372 = por %p370, %p371
      %p373 = scmp.ne.s32.totalorder %s365, %s367
      %p374 = scmp.eq.s32.totalorder %s51, 5
      %p375 = por %p373, %p374
      %p376 = scmp.ne.s32.totalorder %s367, %s368
      %p377 = scmp.eq.s32.totalorder %s51, 0
      %p378 = por %p376, %p377
      %p379 = scmp.ne.s32.totalorder %s367, %s368
      %p380 = scmp.eq.s32.totalorder %s52, 5
      %p381 = por %p379, %p380
      %p383 = scmp.ne.s32.totalorder %s368, %s382
      %p384 = scmp.eq.s32.totalorder %s52, 0
      %p385 = por %p383, %p384
      %s387 = sadd.s32 %s386, 1
      %p390 = scmp.eq.s32.totalorder %s46, 5
      %p391 = scmp.ne.s32.totalorder %s386, %s388
      %p392 = scmp.eq.s32.totalorder %s46, 0
      %p393 = por %p391, %p392
      %p394 = scmp.ne.s32.totalorder %s386, %s388
      %p395 = scmp.eq.s32.totalorder %s51, 5
      %p396 = por %p394, %p395
      %p397 = scmp.ne.s32.totalorder %s388, %s389
      %p398 = scmp.eq.s32.totalorder %s51, 0
      %p399 = por %p397, %p398
      %p400 = scmp.ne.s32.totalorder %s388, %s389
      %p401 = scmp.eq.s32.totalorder %s52, 5
      %p402 = por %p400, %p401
      %p404 = scmp.ne.s32.totalorder %s389, %s403
      %p405 = scmp.eq.s32.totalorder %s52, 0
      %p406 = por %p404, %p405
      %s407 = ssub.s32 %s53, %s65
      %p408 = scmp.eq.s32.totalorder %s407, 0
      %s410 = sadd.s32 %s409, 1
      %s411 = scalar_select %p408, %s409, %s410
      %p414 = pneg %p408
      %p415 = scmp.eq.s32.totalorder %s46, 5
      %p416 = por %p414, %p415
      %p417 = scmp.ne.s32.totalorder %s409, %s412
      %p418 = scmp.eq.s32.totalorder %s46, 0
      %p419 = por %p417, %p418
      %p420 = scmp.ne.s32.totalorder %s409, %s412
      %p421 = scmp.eq.s32.totalorder %s51, 5
      %p422 = por %p420, %p421
      %p423 = scmp.ne.s32.totalorder %s412, %s413
      %p424 = scmp.eq.s32.totalorder %s51, 0
      %p425 = por %p423, %p424
      %p426 = scmp.ne.s32.totalorder %s412, %s413
      %p427 = scmp.eq.s32.totalorder %s52, 5
      %p428 = por %p426, %p427
      %p430 = scmp.ne.s32.totalorder %s413, %s429
      %p431 = scmp.eq.s32.totalorder %s52, 0
      %p432 = por %p430, %p431
      %p433 = scmp.le.s32.totalorder 1, %s46
      %p434 = scmp.lt.s32.totalorder %s46, 7
      %p435 = pnand %p433, %p434
      %p436 = pneg %p435
      // Predicated region
      $region9: #{tpu_custom_call.1} parent=5 // pred_check
        _
      $region10: #{tpu_custom_call.1} parent=5 // pred_check_branch
        %438 = sbr.rel (%p435) target = $region12
      $region11: #{tpu_custom_call.1} parent=5 // pred_region
        %s439 = ssub.s32 %s46, 1
        // Predicated region
        $region13: #{tpu_custom_call.1} parent=11 // pred_check
          %p440 = pneg %p357
        $region14: #{tpu_custom_call.1} parent=11 // pred_check_branch
          %442 = sbr.rel (%p440) target = $region16
        $region15: #{tpu_custom_call.1} parent=11 // pred_region
          %s444 = ssub.s32 128, 128
          %445 = vsyncadd [#allocation20], %s444
          %s447 = sshll.u32 [#allocation21], 4
          %s448 = int_to_ptr.vmem [resolvable:$true] %s447
          %450 = dma.hbm_to_vmem [thread:$0]  %s11, 128, %s448, [#allocation20]
        $region16: #{tpu_custom_call.1} parent=11 // pred_fallthru
          _
        // Predicated region
        $region17: #{tpu_custom_call.1} parent=11 // pred_check
          %p451 = pneg %p378
        $region18: #{tpu_custom_call.1} parent=11 // pred_check_branch
          %453 = sbr.rel (%p451) target = $region20
        $region19: #{tpu_custom_call.1} parent=11 // pred_region
          %s455 = ssub.s32 128, 128
          %456 = vsyncadd [#allocation23], %s455
          %s458 = sshll.u32 [#allocation22], 4
          %s459 = int_to_ptr.vmem [resolvable:$true] %s458
          %461 = dma.hbm_to_vmem [thread:$0]  %s12, 128, %s459, [#allocation23]
        $region20: #{tpu_custom_call.1} parent=11 // pred_fallthru
          _
        // Predicated region
        $region21: #{tpu_custom_call.1} parent=11 // pred_check
          %p462 = pneg %p399
        $region22: #{tpu_custom_call.1} parent=11 // pred_check_branch
          %464 = sbr.rel (%p462) target = $region24
        $region23: #{tpu_custom_call.1} parent=11 // pred_region
          %s466 = ssub.s32 128, 128
          %467 = vsyncadd [#allocation23], %s466
          %s469 = sshll.u32 [#allocation24], 4
          %s470 = int_to_ptr.vmem [resolvable:$true] %s469
          %472 = dma.hbm_to_vmem [thread:$0]  %s13, 128, %s470, [#allocation23]
        $region24: #{tpu_custom_call.1} parent=11 // pred_fallthru
          _
      $region12: #{tpu_custom_call.1} parent=5 // pred_fallthru
        _
      %p473 = scmp.lt.s32.totalorder %s46, 6
      // Predicated region
      $region25: #{tpu_custom_call.1} parent=5 // pred_check
        %p474 = pneg %p473
      $region26: #{tpu_custom_call.1} parent=5 // pred_check_branch
        %476 = sbr.rel (%p474) target = $region28
      $region27: #{tpu_custom_call.1} parent=5 // pred_region
        // Predicated region
        $region29: #{tpu_custom_call.1} parent=27 // pred_check
          %p477 = pneg %p78
        $region30: #{tpu_custom_call.1} parent=27 // pred_check_branch
          %479 = sbr.rel (%p477) target = $region32
        $region31: #{tpu_custom_call.1} parent=27 // pred_region
          %s480 = sand.u32 %s68, 1
          %s481 = scalar_lea.sflag [#allocation5], %s480
          %s482 = sand.u32 %s68, 1
          %s483 = smul.addr %s482, 8
          %s484 = scalar_lea.vmem [#allocation4], %s483
          %s486 = ssub.s32 128, 128
          %487 = vsyncadd %s481, %s486
          %s488 = smul.addr %s53, 128
          %s489 = scalar_lea.hbm %s1, %s488
          %s491 = sshll.u32 %s484, 4
          %s492 = int_to_ptr.vmem [resolvable:$true] %s491
          %494 = dma.hbm_to_vmem [thread:$0]  %s489, 128, %s492, %s481
        $region32: #{tpu_custom_call.1} parent=27 // pred_fallthru
          _
        // Predicated region
        $region33: #{tpu_custom_call.1} parent=27 // pred_check
          %p495 = pneg %p106
        $region34: #{tpu_custom_call.1} parent=27 // pred_check_branch
          %497 = sbr.rel (%p495) target = $region36
        $region35: #{tpu_custom_call.1} parent=27 // pred_region
          %s498 = sand.u32 %s46, 1
          %s499 = scalar_lea.sflag [#allocation8], %s498
          %s500 = sand.u32 %s96, 1
          %s501 = scalar_lea.vmem [#allocation7], %s500
          %s502 = sld [smem:[#allocation3 + %s54]]
          %s504 = ssub.s32 16, 16
          %505 = vsyncadd %s499, %s504
          %s506 = smul.addr %s502, 16
          %s507 = scalar_lea.hbm %s2, %s506
          %s509 = sshll.u32 %s501, 4
          %s510 = int_to_ptr.vmem [resolvable:$true] %s509
          %512 = dma.hbm_to_vmem [thread:$0]  %s507, 16, %s510, %s499
        $region36: #{tpu_custom_call.1} parent=27 // pred_fallthru
          _
        // Predicated region
        $region37: #{tpu_custom_call.1} parent=27 // pred_check
          %p513 = pneg %p134
        $region38: #{tpu_custom_call.1} parent=27 // pred_check_branch
          %515 = sbr.rel (%p513) target = $region40
        $region39: #{tpu_custom_call.1} parent=27 // pred_region
          %s516 = sand.u32 %s46, 1
          %s517 = scalar_lea.sflag [#allocation8], %s516
          %s518 = sand.u32 %s124, 1
          %s519 = smul.addr %s518, 16
          %s520 = scalar_lea.vmem [#allocation9], %s519
          %s521 = sld [smem:[#allocation3 + %s54]]
          %s523 = ssub.s32 256, 256
          %524 = vsyncadd %s517, %s523
          %s525 = smul.addr %s521, 4
          %s526 = smul.addr %s525, 64
          %s527 = scalar_lea.hbm %s3, %s526
          %s528 = sshll.u32 %s520, 4
          %s529 = int_to_ptr.vmem [resolvable:$true] %s528
          %534 = dma.hbm_to_vmem [thread:$0]  %s527, 256, %s529, %s517, 64, 64, 4
        $region40: #{tpu_custom_call.1} parent=27 // pred_fallthru
          _
        // Predicated region
        $region41: #{tpu_custom_call.1} parent=27 // pred_check
          %p535 = pneg %p162
        $region42: #{tpu_custom_call.1} parent=27 // pred_check_branch
          %537 = sbr.rel (%p535) target = $region44
        $region43: #{tpu_custom_call.1} parent=27 // pred_region
          %s538 = sand.u32 %s46, 1
          %s539 = scalar_lea.sflag [#allocation11], %s538
          %s540 = sand.u32 %s152, 1
          %s541 = smul.addr %s540, 16
          %s542 = scalar_lea.vmem [#allocation10], %s541
          %s543 = sld [smem:[#allocation3 + %s54]]
          %s545 = ssub.s32 256, 256
          %546 = vsyncadd %s539, %s545
          %s547 = smul.addr %s543, 4
          %s548 = smul.addr %s547, 64
          %s549 = scalar_lea.hbm %s4, %s548
          %s550 = sshll.u32 %s542, 4
          %s551 = int_to_ptr.vmem [resolvable:$true] %s550
          %556 = dma.hbm_to_vmem [thread:$0]  %s549, 256, %s551, %s539, 64, 64, 4
        $region44: #{tpu_custom_call.1} parent=27 // pred_fallthru
          _
        // Predicated region
        $region45: #{tpu_custom_call.1} parent=27 // pred_check
          %p557 = pneg %p190
        $region46: #{tpu_custom_call.1} parent=27 // pred_check_branch
          %559 = sbr.rel (%p557) target = $region48
        $region47: #{tpu_custom_call.1} parent=27 // pred_region
          %s560 = sand.u32 %s46, 1
          %s561 = scalar_lea.sflag [#allocation11], %s560
          %s562 = sand.u32 %s180, 1
          %s563 = smul.addr %s562, 16
          %s564 = scalar_lea.vmem [#allocation12], %s563
          %s565 = sld [smem:[#allocation3 + %s54]]
          %s567 = ssub.s32 256, 256
          %568 = vsyncadd %s561, %s567
          %s569 = smul.addr %s565, 4
          %s570 = smul.addr %s569, 64
          %s571 = scalar_lea.hbm %s5, %s570
          %s572 = sshll.u32 %s564, 4
          %s573 = int_to_ptr.vmem [resolvable:$true] %s572
          %578 = dma.hbm_to_vmem [thread:$0]  %s571, 256, %s573, %s561, 64, 64, 4
        $region48: #{tpu_custom_call.1} parent=27 // pred_fallthru
          _
        // Predicated region
        $region49: #{tpu_custom_call.1} parent=27 // pred_check
          %p579 = pneg %p218
        $region50: #{tpu_custom_call.1} parent=27 // pred_check_branch
          %581 = sbr.rel (%p579) target = $region52
        $region51: #{tpu_custom_call.1} parent=27 // pred_region
          %s582 = sand.u32 %s46, 1
          %s583 = scalar_lea.sflag [#allocation14], %s582
          %s584 = sand.u32 %s208, 1
          %s585 = smul.addr %s584, 16
          %s586 = scalar_lea.vmem [#allocation13], %s585
          %s587 = sld [smem:[#allocation3 + %s54]]
          %s589 = ssub.s32 256, 256
          %590 = vsyncadd %s583, %s589
          %s591 = smul.addr %s587, 4
          %s592 = smul.addr %s591, 64
          %s593 = scalar_lea.hbm %s6, %s592
          %s594 = sshll.u32 %s586, 4
          %s595 = int_to_ptr.vmem [resolvable:$true] %s594
          %600 = dma.hbm_to_vmem [thread:$0]  %s593, 256, %s595, %s583, 64, 64, 4
        $region52: #{tpu_custom_call.1} parent=27 // pred_fallthru
          _
        // Predicated region
        $region53: #{tpu_custom_call.1} parent=27 // pred_check
          %p601 = pneg %p246
        $region54: #{tpu_custom_call.1} parent=27 // pred_check_branch
          %603 = sbr.rel (%p601) target = $region56
        $region55: #{tpu_custom_call.1} parent=27 // pred_region
          %s604 = sand.u32 %s46, 1
          %s605 = scalar_lea.sflag [#allocation14], %s604
          %s606 = sand.u32 %s236, 1
          %s607 = scalar_lea.vmem [#allocation15], %s606
          %s608 = sld [smem:[#allocation3 + %s54]]
          %s610 = ssub.s32 16, 16
          %611 = vsyncadd %s605, %s610
          %s612 = smul.addr %s608, 16
          %s613 = scalar_lea.hbm %s7, %s612
          %s615 = sshll.u32 %s607, 4
          %s616 = int_to_ptr.vmem [resolvable:$true] %s615
          %618 = dma.hbm_to_vmem [thread:$0]  %s613, 16, %s616, %s605
        $region56: #{tpu_custom_call.1} parent=27 // pred_fallthru
          _
        // Predicated region
        $region57: #{tpu_custom_call.1} parent=27 // pred_check
          %p619 = pneg %p274
        $region58: #{tpu_custom_call.1} parent=27 // pred_check_branch
          %621 = sbr.rel (%p619) target = $region60
        $region59: #{tpu_custom_call.1} parent=27 // pred_region
          %s622 = sand.u32 %s46, 1
          %s623 = scalar_lea.sflag [#allocation17], %s622
          %s624 = sand.u32 %s264, 1
          %s625 = smul.addr %s624, 16
          %s626 = scalar_lea.vmem [#allocation16], %s625
          %s627 = sld [smem:[#allocation3 + %s54]]
          %s629 = ssub.s32 256, 256
          %630 = vsyncadd %s623, %s629
          %s631 = smul.addr %s627, 4
          %s632 = smul.addr %s631, 64
          %s633 = scalar_lea.hbm %s8, %s632
          %s634 = sshll.u32 %s626, 4
          %s635 = int_to_ptr.vmem [resolvable:$true] %s634
          %640 = dma.hbm_to_vmem [thread:$0]  %s633, 256, %s635, %s623, 64, 64, 4
        $region60: #{tpu_custom_call.1} parent=27 // pred_fallthru
          _
        // Predicated region
        $region61: #{tpu_custom_call.1} parent=27 // pred_check
          %p641 = pneg %p302
        $region62: #{tpu_custom_call.1} parent=27 // pred_check_branch
          %643 = sbr.rel (%p641) target = $region64
        $region63: #{tpu_custom_call.1} parent=27 // pred_region
          %s644 = sand.u32 %s46, 1
          %s645 = scalar_lea.sflag [#allocation17], %s644
          %s646 = sand.u32 %s292, 1
          %s647 = smul.addr %s646, 16
          %s648 = scalar_lea.vmem [#allocation18], %s647
          %s649 = sld [smem:[#allocation3 + %s54]]
          %s651 = ssub.s32 256, 256
          %652 = vsyncadd %s645, %s651
          %s653 = smul.addr %s649, 4
          %s654 = smul.addr %s653, 64
          %s655 = scalar_lea.hbm %s9, %s654
          %s656 = sshll.u32 %s648, 4
          %s657 = int_to_ptr.vmem [resolvable:$true] %s656
          %662 = dma.hbm_to_vmem [thread:$0]  %s655, 256, %s657, %s645, 64, 64, 4
        $region64: #{tpu_custom_call.1} parent=27 // pred_fallthru
          _
        // Predicated region
        $region65: #{tpu_custom_call.1} parent=27 // pred_check
          %p663 = pneg %p330
        $region66: #{tpu_custom_call.1} parent=27 // pred_check_branch
          %665 = sbr.rel (%p663) target = $region68
        $region67: #{tpu_custom_call.1} parent=27 // pred_region
          %s666 = sand.u32 %s46, 1
          %s667 = scalar_lea.sflag [#allocation20], %s666
          %s668 = sand.u32 %s320, 1
          %s669 = smul.addr %s668, 48
          %s670 = scalar_lea.vmem [#allocation19], %s669
          %s671 = sld [smem:[#allocation3 + %s54]]
          %s673 = ssub.s32 768, 768
          %674 = vsyncadd %s667, %s673
          %s675 = smul.addr %s671, 12
          %s676 = smul.addr %s675, 64
          %s677 = scalar_lea.hbm %s10, %s676
          %s678 = sshll.u32 %s670, 4
          %s679 = int_to_ptr.vmem [resolvable:$true] %s678
          %684 = dma.hbm_to_vmem [thread:$0]  %s677, 768, %s679, %s667, 64, 64, 4
        $region68: #{tpu_custom_call.1} parent=27 // pred_fallthru
          _
      $region28: #{tpu_custom_call.1} parent=5 // pred_fallthru
        _
      %p685 = scmp.le.s32.totalorder 1, %s46
      %p686 = scmp.lt.s32.totalorder %s46, 7
      %p687 = pnand %p685, %p686
      %p688 = pneg %p687
      // Predicated region
      $region69: #{tpu_custom_call.1} parent=5 // pred_check
        _
      $region70: #{tpu_custom_call.1} parent=5 // pred_check_branch
        %690 = sbr.rel (%p687) target = $region72
      $region71: #{tpu_custom_call.1} parent=5 // pred_region
        %s691 = ssub.s32 %s46, 1
        %s692 = sand.u32 %s71, 1
        %s693 = scalar_lea.sflag [#allocation5], %s692
        %s694 = sand.u32 %s71, 1
        %s695 = smul.addr %s694, 8
        %s696 = scalar_lea.vmem [#allocation4], %s695
        // Predicated region
        $region73: #{tpu_custom_call.1} parent=71 // pred_check
          %p697 = pneg %p84
        $region74: #{tpu_custom_call.1} parent=71 // pred_check_branch
          %699 = sbr.rel (%p697) target = $region76
        $region75: #{tpu_custom_call.1} parent=71 // pred_region
          %700 = dma.done %s693, 128
        $region76: #{tpu_custom_call.1} parent=71 // pred_fallthru
          _
        %s701 = sand.u32 %s51, 1
        %s702 = scalar_lea.sflag [#allocation8], %s701
        %s703 = sand.u32 %s99, 1
        %s704 = scalar_lea.vmem [#allocation7], %s703
        // Predicated region
        $region77: #{tpu_custom_call.1} parent=71 // pred_check
          %p705 = pneg %p112
        $region78: #{tpu_custom_call.1} parent=71 // pred_check_branch
          %707 = sbr.rel (%p705) target = $region80
        $region79: #{tpu_custom_call.1} parent=71 // pred_region
          %708 = dma.done %s702, 16
        $region80: #{tpu_custom_call.1} parent=71 // pred_fallthru
          _
        %s709 = sand.u32 %s51, 1
        %s710 = scalar_lea.sflag [#allocation8], %s709
        %s711 = sand.u32 %s127, 1
        %s712 = smul.addr %s711, 16
        %s713 = scalar_lea.vmem [#allocation9], %s712
        // Predicated region
        $region81: #{tpu_custom_call.1} parent=71 // pred_check
          %p714 = pneg %p140
        $region82: #{tpu_custom_call.1} parent=71 // pred_check_branch
          %716 = sbr.rel (%p714) target = $region84
        $region83: #{tpu_custom_call.1} parent=71 // pred_region
          %717 = dma.done %s710, 256
        $region84: #{tpu_custom_call.1} parent=71 // pred_fallthru
          _
        %s718 = sand.u32 %s51, 1
        %s719 = scalar_lea.sflag [#allocation11], %s718
        %s720 = sand.u32 %s155, 1
        %s721 = smul.addr %s720, 16
        %s722 = scalar_lea.vmem [#allocation10], %s721
        // Predicated region
        $region85: #{tpu_custom_call.1} parent=71 // pred_check
          %p723 = pneg %p168
        $region86: #{tpu_custom_call.1} parent=71 // pred_check_branch
          %725 = sbr.rel (%p723) target = $region88
        $region87: #{tpu_custom_call.1} parent=71 // pred_region
          %726 = dma.done %s719, 256
        $region88: #{tpu_custom_call.1} parent=71 // pred_fallthru
          _
        %s727 = sand.u32 %s51, 1
        %s728 = scalar_lea.sflag [#allocation11], %s727
        %s729 = sand.u32 %s183, 1
        %s730 = smul.addr %s729, 16
        %s731 = scalar_lea.vmem [#allocation12], %s730
        // Predicated region
        $region89: #{tpu_custom_call.1} parent=71 // pred_check
          %p732 = pneg %p196
        $region90: #{tpu_custom_call.1} parent=71 // pred_check_branch
          %734 = sbr.rel (%p732) target = $region92
        $region91: #{tpu_custom_call.1} parent=71 // pred_region
          %735 = dma.done %s728, 256
        $region92: #{tpu_custom_call.1} parent=71 // pred_fallthru
          _
        %s736 = sand.u32 %s51, 1
        %s737 = scalar_lea.sflag [#allocation14], %s736
        %s738 = sand.u32 %s211, 1
        %s739 = smul.addr %s738, 16
        %s740 = scalar_lea.vmem [#allocation13], %s739
        // Predicated region
        $region93: #{tpu_custom_call.1} parent=71 // pred_check
          %p741 = pneg %p224
        $region94: #{tpu_custom_call.1} parent=71 // pred_check_branch
          %743 = sbr.rel (%p741) target = $region96
        $region95: #{tpu_custom_call.1} parent=71 // pred_region
          %744 = dma.done %s737, 256
        $region96: #{tpu_custom_call.1} parent=71 // pred_fallthru
          _
        %s745 = sand.u32 %s51, 1
        %s746 = scalar_lea.sflag [#allocation14], %s745
        %s747 = sand.u32 %s239, 1
        %s748 = scalar_lea.vmem [#allocation15], %s747
        // Predicated region
        $region97: #{tpu_custom_call.1} parent=71 // pred_check
          %p749 = pneg %p252
        $region98: #{tpu_custom_call.1} parent=71 // pred_check_branch
          %751 = sbr.rel (%p749) target = $region100
        $region99: #{tpu_custom_call.1} parent=71 // pred_region
          %752 = dma.done %s746, 16
        $region100: #{tpu_custom_call.1} parent=71 // pred_fallthru
          _
        %s753 = sand.u32 %s51, 1
        %s754 = scalar_lea.sflag [#allocation17], %s753
        %s755 = sand.u32 %s267, 1
        %s756 = smul.addr %s755, 16
        %s757 = scalar_lea.vmem [#allocation16], %s756
        // Predicated region
        $region101: #{tpu_custom_call.1} parent=71 // pred_check
          %p758 = pneg %p280
        $region102: #{tpu_custom_call.1} parent=71 // pred_check_branch
          %760 = sbr.rel (%p758) target = $region104
        $region103: #{tpu_custom_call.1} parent=71 // pred_region
          %761 = dma.done %s754, 256
        $region104: #{tpu_custom_call.1} parent=71 // pred_fallthru
          _
        %s762 = sand.u32 %s51, 1
        %s763 = scalar_lea.sflag [#allocation17], %s762
        %s764 = sand.u32 %s295, 1
        %s765 = smul.addr %s764, 16
        %s766 = scalar_lea.vmem [#allocation18], %s765
        // Predicated region
        $region105: #{tpu_custom_call.1} parent=71 // pred_check
          %p767 = pneg %p308
        $region106: #{tpu_custom_call.1} parent=71 // pred_check_branch
          %769 = sbr.rel (%p767) target = $region108
        $region107: #{tpu_custom_call.1} parent=71 // pred_region
          %770 = dma.done %s763, 256
        $region108: #{tpu_custom_call.1} parent=71 // pred_fallthru
          _
        %s771 = sand.u32 %s51, 1
        %s772 = scalar_lea.sflag [#allocation20], %s771
        %s773 = sand.u32 %s323, 1
        %s774 = smul.addr %s773, 48
        %s775 = scalar_lea.vmem [#allocation19], %s774
        // Predicated region
        $region109: #{tpu_custom_call.1} parent=71 // pred_check
          %p776 = pneg %p336
        $region110: #{tpu_custom_call.1} parent=71 // pred_check_branch
          %778 = sbr.rel (%p776) target = $region112
        $region111: #{tpu_custom_call.1} parent=71 // pred_region
          %779 = dma.done %s772, 768
        $region112: #{tpu_custom_call.1} parent=71 // pred_fallthru
          _
        // Predicated region
        $region113: #{tpu_custom_call.1} parent=71 // pred_check
          %p780 = pneg %p357
        $region114: #{tpu_custom_call.1} parent=71 // pred_check_branch
          %782 = sbr.rel (%p780) target = $region116
        $region115: #{tpu_custom_call.1} parent=71 // pred_region
          %783 = dma.done [#allocation20], 128
        $region116: #{tpu_custom_call.1} parent=71 // pred_fallthru
          _
        // Predicated region
        $region117: #{tpu_custom_call.1} parent=71 // pred_check
          %p784 = pneg %p378
        $region118: #{tpu_custom_call.1} parent=71 // pred_check_branch
          %786 = sbr.rel (%p784) target = $region120
        $region119: #{tpu_custom_call.1} parent=71 // pred_region
          %787 = dma.done [#allocation23], 128
        $region120: #{tpu_custom_call.1} parent=71 // pred_fallthru
          _
        // Predicated region
        $region121: #{tpu_custom_call.1} parent=71 // pred_check
          %p788 = pneg %p399
        $region122: #{tpu_custom_call.1} parent=71 // pred_check_branch
          %790 = sbr.rel (%p788) target = $region124
        $region123: #{tpu_custom_call.1} parent=71 // pred_region
          %791 = dma.done [#allocation23], 128
        $region124: #{tpu_custom_call.1} parent=71 // pred_fallthru
          _
        %s792 = sand.u32 %s71, 1
        %s793 = scalar_lea.sflag [#allocation5], %s792
        %s794 = sand.u32 %s71, 1
        %s795 = smul.addr %s794, 8
        %s796 = scalar_lea.vmem [#allocation4], %s795
        %p797 = pneg %p84
        %p798 = pneg %p81
        %s799 = sand.u32 %s51, 1
        %s800 = scalar_lea.sflag [#allocation8], %s799
        %s801 = sand.u32 %s99, 1
        %s802 = scalar_lea.vmem [#allocation7], %s801
        %p803 = pneg %p112
        %p804 = pneg %p109
        %s805 = sand.u32 %s51, 1
        %s806 = scalar_lea.sflag [#allocation8], %s805
        %s807 = sand.u32 %s127, 1
        %s808 = smul.addr %s807, 16
        %s809 = scalar_lea.vmem [#allocation9], %s808
        %p810 = pneg %p140
        %p811 = pneg %p137
        %s812 = sand.u32 %s51, 1
        %s813 = scalar_lea.sflag [#allocation11], %s812
        %s814 = sand.u32 %s155, 1
        %s815 = smul.addr %s814, 16
        %s816 = scalar_lea.vmem [#allocation10], %s815
        %p817 = pneg %p168
        %p818 = pneg %p165
        %s819 = sand.u32 %s51, 1
        %s820 = scalar_lea.sflag [#allocation11], %s819
        %s821 = sand.u32 %s183, 1
        %s822 = smul.addr %s821, 16
        %s823 = scalar_lea.vmem [#allocation12], %s822
        %p824 = pneg %p196
        %p825 = pneg %p193
        %s826 = sand.u32 %s51, 1
        %s827 = scalar_lea.sflag [#allocation14], %s826
        %s828 = sand.u32 %s211, 1
        %s829 = smul.addr %s828, 16
        %s830 = scalar_lea.vmem [#allocation13], %s829
        %p831 = pneg %p224
        %p832 = pneg %p221
        %s833 = sand.u32 %s51, 1
        %s834 = scalar_lea.sflag [#allocation14], %s833
        %s835 = sand.u32 %s239, 1
        %s836 = scalar_lea.vmem [#allocation15], %s835
        %p837 = pneg %p252
        %p838 = pneg %p249
        %s839 = sand.u32 %s51, 1
        %s840 = scalar_lea.sflag [#allocation17], %s839
        %s841 = sand.u32 %s267, 1
        %s842 = smul.addr %s841, 16
        %s843 = scalar_lea.vmem [#allocation16], %s842
        %p844 = pneg %p280
        %p845 = pneg %p277
        %s846 = sand.u32 %s51, 1
        %s847 = scalar_lea.sflag [#allocation17], %s846
        %s848 = sand.u32 %s295, 1
        %s849 = smul.addr %s848, 16
        %s850 = scalar_lea.vmem [#allocation18], %s849
        %p851 = pneg %p308
        %p852 = pneg %p305
        %s853 = sand.u32 %s51, 1
        %s854 = scalar_lea.sflag [#allocation20], %s853
        %s855 = sand.u32 %s323, 1
        %s856 = smul.addr %s855, 48
        %s857 = scalar_lea.vmem [#allocation19], %s856
        %p858 = pneg %p336
        %p859 = pneg %p333
        %p860 = pneg %p357
        %p861 = pneg %p354
        %p862 = pneg %p378
        %p863 = pneg %p375
        %p864 = pneg %p399
        %p865 = pneg %p396
        %p866 = pneg %p425
        %p867 = pneg %p422
        %s868 = sand.u32 %s412, 1
        %s869 = scalar_lea.sflag [#allocation6], %s868
        %s870 = sand.u32 %s412, 1
        %s871 = smul.addr %s870, 8
        %s872 = scalar_lea.vmem [#allocation25], %s871
        %s873 = sld [smem:[#allocation3 + %s56]]
        %s874 = sld [smem:[#allocation3 + %s56]]
        %s875 = sld [smem:[#allocation3 + %s56]]
        %s876 = sld [smem:[#allocation3 + %s56]]
        %s877 = sld [smem:[#allocation3 + %s56]]
        %s878 = sld [smem:[#allocation3 + %s56]]
        %s879 = sld [smem:[#allocation3 + %s56]]
        %s880 = sld [smem:[#allocation3 + %s56]]
        %s881 = sld [smem:[#allocation3 + %s56]]
        %p883 = scmp.eq.s32.totalorder %s56, 0
        // Predicated region
        $region125: #{tpu_custom_call.1} parent=71 // pred_check
          %p884 = pneg %p883
        $region126: #{tpu_custom_call.1} parent=71 // pred_check_branch
          %886 = sbr.rel (%p884) target = $region128
        $region127: #{tpu_custom_call.1} parent=71 // pred_region
          %v887 = vld [vmem:[%s696] sm:$0xff]
          %vm888 = vcmask 261120
          %889 = vst.msk [vmem:[%s872] sm:$0xff] %vm888, %v887
        $region128: #{tpu_custom_call.1} parent=71 // pred_fallthru
          _
        %v890 = vld [vmem:[%s872] sm:$0xff]
        %v891 = vld [vmem:[#allocation21] sm:$0xff]
        %v892 = vld [vmem:[#allocation22] sm:$0xff]
        %v893 = vld [vmem:[#allocation24] sm:$0xff]
        %v894 = vld [vmem:[%s704] sm:$0x1]
        %v895 = vmul.f32 %v890, %v890
        %vm896 = vcmask 261120
        %v897 = vsel %vm896, %v895, 0.0
        %898 = vadd.xlane.f32.xlu0 %v897
        %v899 = vpop.xlane.xlu0 %898
        %v900 = vrcp.pop 32.0
        %v901 = vmul.f32 %v899, %v900
        %v902 = vadd.f32 %v901, 1e-05
        %v903 = vrsqrt.pop %v902
        %v904 = vmul.f32 %v890, %v903
        %v906 = vlaneseq
        %v907 = vshrl.u32 %v906, 7
        %v908 = vsub.s32 0, %v907
        %v909 = vrot.slane %v894, %v908
        %v911 = vmul.f32 %v904, %v909
        %v912 = vpack.c.bf16 %v911, %v911
        %v913 = vld [vmem:[%s713] sm:$0xf]
        %v914 = vld [vmem:[%s713 + $0x4] sm:$0xf]
        %v915 = vld [vmem:[%s713 + $0x8] sm:$0xf]
        %v916 = vld [vmem:[%s713 + $0xc] sm:$0xf]
        %v921 = vunpack.c.l.b16 %v913
        %v922 = vunpack.c.l.b16 %v914
        %v923 = vunpack.c.l.b16 %v915
        %v924 = vunpack.c.l.b16 %v916
        %v925 = vpack.c.b16 %v922, %v921
        %v926 = vpack.c.b16 %v924, %v923
        %v930 = vsel %vm896, %v912, 0
        %932 = vmatprep.subr.bf16.mxu0 0
        %933 = vmatpush1.bf16.msra.mxu0 %v925
        %934 = vmatprep.subr.bf16.mxu0 0
        %935 = vmatpush1.bf16.msra.mxu0 %v926
        %936 = vmatprep.subr.bf16.mxu0 0
        %937 = vmatpush1.bf16.msra.mxu0 0
        %938 = vmatprep.subr.bf16.mxu0 0
        %939 = vmatpush1.bf16.msra.mxu0 0
        %940 = vmatprep.subr.bf16.mxu0 0
        %941 = vmatpush1.bf16.msra.mxu0 0
        %942 = vmatprep.subr.bf16.mxu0 0
        %943 = vmatpush1.bf16.msra.mxu0 0
        %944 = vmatprep.subr.bf16.mxu0 0
        %945 = vmatpush1.bf16.msra.mxu0 0
        %946 = vmatprep.subr.bf16.mxu0 0
        %947 = vmatpush1.bf16.msra.mxu0 0
        %948 = vmatprep.subr.bf16.mxu0 0
        %949 = vmatpush1.bf16.msra.mxu0 0
        %950 = vmatprep.subr.bf16.mxu0 0
        %951 = vmatpush1.bf16.msra.mxu0 0
        %952 = vmatprep.subr.bf16.mxu0 0
        %953 = vmatpush1.bf16.msra.mxu0 0
        %954 = vmatprep.subr.bf16.mxu0 0
        %955 = vmatpush1.bf16.msra.mxu0 0
        %956 = vmatprep.subr.bf16.mxu0 0
        %957 = vmatpush1.bf16.msra.mxu0 0
        %958 = vmatprep.subr.bf16.mxu0 0
        %959 = vmatpush1.bf16.msra.mxu0 0
        %960 = vmatprep.subr.bf16.mxu0 0
        %961 = vmatpush1.bf16.msra.mxu0 0
        %962 = vmatprep.subr.bf16.mxu0 0
        %963 = vmatpush1.bf16.msra.mxu0 0
        %964 = vmatprep.mubr.bf16.mxu0 0
        %965 = vmatmul.mubr.bf16.gmra.mrb[0].mxu0 %v930
        %v966 = vpop.f32.mrb[0].mxu0
        %v967 = vadd.f32 0.0, %v966
        %v968 = vpop.f32.mrb[0].mxu0
        %v969 = vpop.f32.mrb[0].mxu0
        %v970 = vpop.f32.mrb[0].mxu0
        %971 = vdwg.mxu0
        %v972 = vld [vmem:[%s722] sm:$0xf]
        %v973 = vld [vmem:[%s722 + $0x4] sm:$0xf]
        %v974 = vld [vmem:[%s722 + $0x8] sm:$0xf]
        %v975 = vld [vmem:[%s722 + $0xc] sm:$0xf]
        %v980 = vunpack.c.l.b16 %v972
        %v981 = vunpack.c.l.b16 %v973
        %v982 = vunpack.c.l.b16 %v974
        %v983 = vunpack.c.l.b16 %v975
        %v984 = vpack.c.b16 %v981, %v980
        %v985 = vpack.c.b16 %v983, %v982
        %988 = vmatprep.subr.bf16.mxu0 0
        %989 = vmatpush1.bf16.msra.mxu0 %v984
        %990 = vmatprep.subr.bf16.mxu0 0
        %991 = vmatpush1.bf16.msra.mxu0 %v985
        %992 = vmatprep.subr.bf16.mxu0 0
        %993 = vmatpush1.bf16.msra.mxu0 0
        %994 = vmatprep.subr.bf16.mxu0 0
        %995 = vmatpush1.bf16.msra.mxu0 0
        %996 = vmatprep.subr.bf16.mxu0 0
        %997 = vmatpush1.bf16.msra.mxu0 0
        %998 = vmatprep.subr.bf16.mxu0 0
        %999 = vmatpush1.bf16.msra.mxu0 0
        %1000 = vmatprep.subr.bf16.mxu0 0
        %1001 = vmatpush1.bf16.msra.mxu0 0
        %1002 = vmatprep.subr.bf16.mxu0 0
        %1003 = vmatpush1.bf16.msra.mxu0 0
        %1004 = vmatprep.subr.bf16.mxu0 0
        %1005 = vmatpush1.bf16.msra.mxu0 0
        %1006 = vmatprep.subr.bf16.mxu0 0
        %1007 = vmatpush1.bf16.msra.mxu0 0
        %1008 = vmatprep.subr.bf16.mxu0 0
        %1009 = vmatpush1.bf16.msra.mxu0 0
        %1010 = vmatprep.subr.bf16.mxu0 0
        %1011 = vmatpush1.bf16.msra.mxu0 0
        %1012 = vmatprep.subr.bf16.mxu0 0
        %1013 = vmatpush1.bf16.msra.mxu0 0
        %1014 = vmatprep.subr.bf16.mxu0 0
        %1015 = vmatpush1.bf16.msra.mxu0 0
        %1016 = vmatprep.subr.bf16.mxu0 0
        %1017 = vmatpush1.bf16.msra.mxu0 0
        %1018 = vmatprep.subr.bf16.mxu0 0
        %1019 = vmatpush1.bf16.msra.mxu0 0
        %1020 = vmatprep.mubr.bf16.mxu0 0
        %1021 = vmatmul.mubr.bf16.gmra.mrb[0].mxu0 %v930
        %v1022 = vpop.f32.mrb[0].mxu0
        %v1023 = vadd.f32 0.0, %v1022
        %v1024 = vpop.f32.mrb[0].mxu0
        %v1025 = vpop.f32.mrb[0].mxu0
        %v1026 = vpop.f32.mrb[0].mxu0
        %1027 = vdwg.mxu0
        %v1028 = vld [vmem:[%s731] sm:$0xf]
        %v1029 = vld [vmem:[%s731 + $0x4] sm:$0xf]
        %v1030 = vld [vmem:[%s731 + $0x8] sm:$0xf]
        %v1031 = vld [vmem:[%s731 + $0xc] sm:$0xf]
        %v1036 = vunpack.c.l.b16 %v1028
        %v1037 = vunpack.c.l.b16 %v1029
        %v1038 = vunpack.c.l.b16 %v1030
        %v1039 = vunpack.c.l.b16 %v1031
        %v1040 = vpack.c.b16 %v1037, %v1036
        %v1041 = vpack.c.b16 %v1039, %v1038
        %1044 = vmatprep.subr.bf16.mxu0 0
        %1045 = vmatpush1.bf16.msra.mxu0 %v1040
        %1046 = vmatprep.subr.bf16.mxu0 0
        %1047 = vmatpush1.bf16.msra.mxu0 %v1041
        %1048 = vmatprep.subr.bf16.mxu0 0
        %1049 = vmatpush1.bf16.msra.mxu0 0
        %1050 = vmatprep.subr.bf16.mxu0 0
        %1051 = vmatpush1.bf16.msra.mxu0 0
        %1052 = vmatprep.subr.bf16.mxu0 0
        %1053 = vmatpush1.bf16.msra.mxu0 0
        %1054 = vmatprep.subr.bf16.mxu0 0
        %1055 = vmatpush1.bf16.msra.mxu0 0
        %1056 = vmatprep.subr.bf16.mxu0 0
        %1057 = vmatpush1.bf16.msra.mxu0 0
        %1058 = vmatprep.subr.bf16.mxu0 0
        %1059 = vmatpush1.bf16.msra.mxu0 0
        %1060 = vmatprep.subr.bf16.mxu0 0
        %1061 = vmatpush1.bf16.msra.mxu0 0
        %1062 = vmatprep.subr.bf16.mxu0 0
        %1063 = vmatpush1.bf16.msra.mxu0 0
        %1064 = vmatprep.subr.bf16.mxu0 0
        %1065 = vmatpush1.bf16.msra.mxu0 0
        %1066 = vmatprep.subr.bf16.mxu0 0
        %1067 = vmatpush1.bf16.msra.mxu0 0
        %1068 = vmatprep.subr.bf16.mxu0 0
        %1069 = vmatpush1.bf16.msra.mxu0 0
        %1070 = vmatprep.subr.bf16.mxu0 0
        %1071 = vmatpush1.bf16.msra.mxu0 0
        %1072 = vmatprep.subr.bf16.mxu0 0
        %1073 = vmatpush1.bf16.msra.mxu0 0
        %1074 = vmatprep.subr.bf16.mxu0 0
        %1075 = vmatpush1.bf16.msra.mxu0 0
        %1076 = vmatprep.mubr.bf16.mxu0 0
        %1077 = vmatmul.mubr.bf16.gmra.mrb[0].mxu0 %v930
        %v1078 = vpop.f32.mrb[0].mxu0
        %v1079 = vadd.f32 0.0, %v1078
        %v1080 = vpop.f32.mrb[0].mxu0
        %v1081 = vpop.f32.mrb[0].mxu0
        %v1082 = vpop.f32.mrb[0].mxu0
        %1083 = vdwg.mxu0
        %v1084 = vpack.c.bf16 %v1079, %v1079
        %1086 = vrot.lane.b32.xlu0 %v967, 120
        %v1087 = vpop.permute.xlu0 %1086
        %1089 = vrot.lane.b32.xlu0 %v967, 112
        %v1090 = vpop.permute.xlu0 %1089
        %1092 = vrot.lane.b32.xlu0 %v967, 104
        %v1093 = vpop.permute.xlu0 %1092
        %v1095 = vmul.f32 %v967, %v891
        %v1096 = vmul.f32 %v1087, %v891
        %v1097 = vmul.f32 %v1090, %v891
        %v1098 = vmul.f32 %v1093, %v891
        %1099 = vrot.lane.b32.xlu0 %v967, 127
        %v1100 = vpop.permute.xlu0 %1099
        %1101 = vrot.lane.b32.xlu0 %v1087, 127
        %v1102 = vpop.permute.xlu0 %1101
        %1103 = vrot.lane.b32.xlu0 %v1090, 127
        %v1104 = vpop.permute.xlu0 %1103
        %1105 = vrot.lane.b32.xlu0 %v1093, 127
        %v1106 = vpop.permute.xlu0 %1105
        %1111 = vrot.lane.b32.xlu0 %v967, 7
        %v1112 = vpop.permute.xlu0 %1111
        %1113 = vrot.lane.b32.xlu0 %v1087, 7
        %v1114 = vpop.permute.xlu0 %1113
        %1115 = vrot.lane.b32.xlu0 %v1090, 7
        %v1116 = vpop.permute.xlu0 %1115
        %1117 = vrot.lane.b32.xlu0 %v1093, 7
        %v1118 = vpop.permute.xlu0 %1117
        %vm1123 = vcmask 56320
        %v1124 = vsel %vm1123, %v1100, %v1112
        %v1125 = vsel %vm1123, %v1102, %v1114
        %v1126 = vsel %vm1123, %v1104, %v1116
        %v1127 = vsel %vm1123, %v1106, %v1118
        %v1128 = vmul.f32 %v1124, %v892
        %v1129 = vmul.f32 %v1125, %v892
        %v1130 = vmul.f32 %v1126, %v892
        %v1131 = vmul.f32 %v1127, %v892
        %v1132 = vadd.f32 %v1095, %v1128
        %v1133 = vadd.f32 %v1096, %v1129
        %v1134 = vadd.f32 %v1097, %v1130
        %v1135 = vadd.f32 %v1098, %v1131
        %1136 = vrot.lane.b32.xlu0 %v967, 121
        %v1137 = vpop.permute.xlu0 %1136
        %1138 = vrot.lane.b32.xlu0 %v1087, 121
        %v1139 = vpop.permute.xlu0 %1138
        %1140 = vrot.lane.b32.xlu0 %v1090, 121
        %v1141 = vpop.permute.xlu0 %1140
        %1142 = vrot.lane.b32.xlu0 %v1093, 121
        %v1143 = vpop.permute.xlu0 %1142
        %1148 = vrot.lane.b32.xlu0 %v967, 1
        %v1149 = vpop.permute.xlu0 %1148
        %1150 = vrot.lane.b32.xlu0 %v1087, 1
        %v1151 = vpop.permute.xlu0 %1150
        %1152 = vrot.lane.b32.xlu0 %v1090, 1
        %v1153 = vpop.permute.xlu0 %1152
        %1154 = vrot.lane.b32.xlu0 %v1093, 1
        %v1155 = vpop.permute.xlu0 %1154
        %vm1160 = vcmask 7168
        %v1161 = vsel %vm1160, %v1137, %v1149
        %v1162 = vsel %vm1160, %v1139, %v1151
        %v1163 = vsel %vm1160, %v1141, %v1153
        %v1164 = vsel %vm1160, %v1143, %v1155
        %v1165 = vmul.f32 %v1161, %v893
        %v1166 = vmul.f32 %v1162, %v893
        %v1167 = vmul.f32 %v1163, %v893
        %v1168 = vmul.f32 %v1164, %v893
        %v1169 = vadd.f32 %v1132, %v1165
        %v1170 = vadd.f32 %v1133, %v1166
        %v1171 = vadd.f32 %v1134, %v1167
        %v1172 = vadd.f32 %v1135, %v1168
        %v1173 = vmul.f32 %v1169, 0.35355338
        %v1174 = vmul.f32 %v1170, 0.35355338
        %v1175 = vmul.f32 %v1171, 0.35355338
        %v1176 = vmul.f32 %v1172, 0.35355338
        %v1177 = vpack.c.bf16 %v1173, %v1173
        %v1178 = vpack.c.bf16 %v1174, %v1174
        %v1179 = vpack.c.bf16 %v1175, %v1175
        %v1180 = vpack.c.bf16 %v1176, %v1176
        %1182 = vrot.lane.b32.xlu0 %v1023, 120
        %v1183 = vpop.permute.xlu0 %1182
        %1185 = vrot.lane.b32.xlu0 %v1023, 112
        %v1186 = vpop.permute.xlu0 %1185
        %1188 = vrot.lane.b32.xlu0 %v1023, 104
        %v1189 = vpop.permute.xlu0 %1188
        %v1191 = vmul.f32 %v1023, %v891
        %v1192 = vmul.f32 %v1183, %v891
        %v1193 = vmul.f32 %v1186, %v891
        %v1194 = vmul.f32 %v1189, %v891
        %1195 = vrot.lane.b32.xlu0 %v1023, 127
        %v1196 = vpop.permute.xlu0 %1195
        %1197 = vrot.lane.b32.xlu0 %v1183, 127
        %v1198 = vpop.permute.xlu0 %1197
        %1199 = vrot.lane.b32.xlu0 %v1186, 127
        %v1200 = vpop.permute.xlu0 %1199
        %1201 = vrot.lane.b32.xlu0 %v1189, 127
        %v1202 = vpop.permute.xlu0 %1201
        %1207 = vrot.lane.b32.xlu0 %v1023, 7
        %v1208 = vpop.permute.xlu0 %1207
        %1209 = vrot.lane.b32.xlu0 %v1183, 7
        %v1210 = vpop.permute.xlu0 %1209
        %1211 = vrot.lane.b32.xlu0 %v1186, 7
        %v1212 = vpop.permute.xlu0 %1211
        %1213 = vrot.lane.b32.xlu0 %v1189, 7
        %v1214 = vpop.permute.xlu0 %1213
        %v1219 = vsel %vm1123, %v1196, %v1208
        %v1220 = vsel %vm1123, %v1198, %v1210
        %v1221 = vsel %vm1123, %v1200, %v1212
        %v1222 = vsel %vm1123, %v1202, %v1214
        %v1223 = vmul.f32 %v1219, %v892
        %v1224 = vmul.f32 %v1220, %v892
        %v1225 = vmul.f32 %v1221, %v892
        %v1226 = vmul.f32 %v1222, %v892
        %v1227 = vadd.f32 %v1191, %v1223
        %v1228 = vadd.f32 %v1192, %v1224
        %v1229 = vadd.f32 %v1193, %v1225
        %v1230 = vadd.f32 %v1194, %v1226
        %1231 = vrot.lane.b32.xlu0 %v1023, 121
        %v1232 = vpop.permute.xlu0 %1231
        %1233 = vrot.lane.b32.xlu0 %v1183, 121
        %v1234 = vpop.permute.xlu0 %1233
        %1235 = vrot.lane.b32.xlu0 %v1186, 121
        %v1236 = vpop.permute.xlu0 %1235
        %1237 = vrot.lane.b32.xlu0 %v1189, 121
        %v1238 = vpop.permute.xlu0 %1237
        %1243 = vrot.lane.b32.xlu0 %v1023, 1
        %v1244 = vpop.permute.xlu0 %1243
        %1245 = vrot.lane.b32.xlu0 %v1183, 1
        %v1246 = vpop.permute.xlu0 %1245
        %1247 = vrot.lane.b32.xlu0 %v1186, 1
        %v1248 = vpop.permute.xlu0 %1247
        %1249 = vrot.lane.b32.xlu0 %v1189, 1
        %v1250 = vpop.permute.xlu0 %1249
        %v1255 = vsel %vm1160, %v1232, %v1244
        %v1256 = vsel %vm1160, %v1234, %v1246
        %v1257 = vsel %vm1160, %v1236, %v1248
        %v1258 = vsel %vm1160, %v1238, %v1250
        %v1259 = vmul.f32 %v1255, %v893
        %v1260 = vmul.f32 %v1256, %v893
        %v1261 = vmul.f32 %v1257, %v893
        %v1262 = vmul.f32 %v1258, %v893
        %v1263 = vadd.f32 %v1227, %v1259
        %v1264 = vadd.f32 %v1228, %v1260
        %v1265 = vadd.f32 %v1229, %v1261
        %v1266 = vadd.f32 %v1230, %v1262
        %v1267 = vpack.c.bf16 %v1263, %v1263
        %v1268 = vpack.c.bf16 %v1264, %v1264
        %v1269 = vpack.c.bf16 %v1265, %v1265
        %v1270 = vpack.c.bf16 %v1266, %v1266
        %1272 = vrot.lane.b32.xlu0 %v1084, 120
        %v1273 = vpop.permute.xlu0 %1272
        %1274 = vrot.lane.b32.xlu0 %v1084, 112
        %v1275 = vpop.permute.xlu0 %1274
        %1276 = vrot.lane.b32.xlu0 %v1084, 104
        %v1277 = vpop.permute.xlu0 %1276
        %vm1278 = vcmask 64512
        %v1280 = vsel %vm1278, %v1177, 0
        %v1283 = vsel %vm1278, %v1267, 0
        %1285 = vmatprep.subr.bf16.mxu0 0
        %1286 = vmatpush1.bf16.xpose.msra.mxu0 %v1283
        %1287 = vmatprep.subr.bf16.mxu0 0
        %1288 = vmatpush1.bf16.xpose.msra.mxu0 0
        %1289 = vmatprep.subr.bf16.mxu0 0
        %1290 = vmatpush1.bf16.xpose.msra.mxu0 0
        %1291 = vmatprep.subr.bf16.mxu0 0
        %1292 = vmatpush1.bf16.xpose.msra.mxu0 0
        %1293 = vmatprep.subr.bf16.mxu0 0
        %1294 = vmatpush1.bf16.xpose.msra.mxu0 0
        %1295 = vmatprep.subr.bf16.mxu0 0
        %1296 = vmatpush1.bf16.xpose.msra.mxu0 0
        %1297 = vmatprep.subr.bf16.mxu0 0
        %1298 = vmatpush1.bf16.xpose.msra.mxu0 0
        %1299 = vmatprep.subr.bf16.mxu0 0
        %1300 = vmatpush1.bf16.xpose.msra.mxu0 0
        %1301 = vmatprep.subr.bf16.mxu0 0
        %1302 = vmatpush1.bf16.xpose.msra.mxu0 0
        %1303 = vmatprep.subr.bf16.mxu0 0
        %1304 = vmatpush1.bf16.xpose.msra.mxu0 0
        %1305 = vmatprep.subr.bf16.mxu0 0
        %1306 = vmatpush1.bf16.xpose.msra.mxu0 0
        %1307 = vmatprep.subr.bf16.mxu0 0
        %1308 = vmatpush1.bf16.xpose.msra.mxu0 0
        %1309 = vmatprep.subr.bf16.mxu0 0
        %1310 = vmatpush1.bf16.xpose.msra.mxu0 0
        %1311 = vmatprep.subr.bf16.mxu0 0
        %1312 = vmatpush1.bf16.xpose.msra.mxu0 0
        %1313 = vmatprep.subr.bf16.mxu0 0
        %1314 = vmatpush1.bf16.xpose.msra.mxu0 0
        %1315 = vmatprep.subr.bf16.mxu0 0
        %1316 = vmatpush1.bf16.xpose.msra.mxu0 0
        %1317 = vmatprep.mubr.bf16.mxu0 0
        %1318 = vmatmul.mubr.bf16.gmra.mrb[0].mxu0 %v1280
        %v1319 = vpop.f32.mrb[0].mxu0
        %v1320 = vadd.f32 0.0, %v1319
        %v1321 = vpop.f32.mrb[0].mxu0
        %v1322 = vpop.f32.mrb[0].mxu0
        %v1323 = vpop.f32.mrb[0].mxu0
        %1324 = vdwg.mxu0
        %v1326 = vsel %vm1278, %v1178, 0
        %v1329 = vsel %vm1278, %v1268, 0
        %1331 = vmatprep.subr.bf16.mxu0 0
        %1332 = vmatpush1.bf16.xpose.msra.mxu0 %v1329
        %1333 = vmatprep.subr.bf16.mxu0 0
        %1334 = vmatpush1.bf16.xpose.msra.mxu0 0
        %1335 = vmatprep.subr.bf16.mxu0 0
        %1336 = vmatpush1.bf16.xpose.msra.mxu0 0
        %1337 = vmatprep.subr.bf16.mxu0 0
        %1338 = vmatpush1.bf16.xpose.msra.mxu0 0
        %1339 = vmatprep.subr.bf16.mxu0 0
        %1340 = vmatpush1.bf16.xpose.msra.mxu0 0
        %1341 = vmatprep.subr.bf16.mxu0 0
        %1342 = vmatpush1.bf16.xpose.msra.mxu0 0
        %1343 = vmatprep.subr.bf16.mxu0 0
        %1344 = vmatpush1.bf16.xpose.msra.mxu0 0
        %1345 = vmatprep.subr.bf16.mxu0 0
        %1346 = vmatpush1.bf16.xpose.msra.mxu0 0
        %1347 = vmatprep.subr.bf16.mxu0 0
        %1348 = vmatpush1.bf16.xpose.msra.mxu0 0
        %1349 = vmatprep.subr.bf16.mxu0 0
        %1350 = vmatpush1.bf16.xpose.msra.mxu0 0
        %1351 = vmatprep.subr.bf16.mxu0 0
        %1352 = vmatpush1.bf16.xpose.msra.mxu0 0
        %1353 = vmatprep.subr.bf16.mxu0 0
        %1354 = vmatpush1.bf16.xpose.msra.mxu0 0
        %1355 = vmatprep.subr.bf16.mxu0 0
        %1356 = vmatpush1.bf16.xpose.msra.mxu0 0
        %1357 = vmatprep.subr.bf16.mxu0 0
        %1358 = vmatpush1.bf16.xpose.msra.mxu0 0
        %1359 = vmatprep.subr.bf16.mxu0 0
        %1360 = vmatpush1.bf16.xpose.msra.mxu0 0
        %1361 = vmatprep.subr.bf16.mxu0 0
        %1362 = vmatpush1.bf16.xpose.msra.mxu0 0
        %1363 = vmatprep.mubr.bf16.mxu0 0
        %1364 = vmatmul.mubr.bf16.gmra.mrb[0].mxu0 %v1326
        %v1365 = vpop.f32.mrb[0].mxu0
        %v1366 = vadd.f32 0.0, %v1365
        %v1367 = vpop.f32.mrb[0].mxu0
        %v1368 = vpop.f32.mrb[0].mxu0
        %v1369 = vpop.f32.mrb[0].mxu0
        %1370 = vdwg.mxu0
        %v1372 = vsel %vm1278, %v1179, 0
        %v1375 = vsel %vm1278, %v1269, 0
        %1377 = vmatprep.subr.bf16.mxu0 0
        %1378 = vmatpush1.bf16.xpose.msra.mxu0 %v1375
        %1379 = vmatprep.subr.bf16.mxu0 0
        %1380 = vmatpush1.bf16.xpose.msra.mxu0 0
        %1381 = vmatprep.subr.bf16.mxu0 0
        %1382 = vmatpush1.bf16.xpose.msra.mxu0 0
        %1383 = vmatprep.subr.bf16.mxu0 0
        %1384 = vmatpush1.bf16.xpose.msra.mxu0 0
        %1385 = vmatprep.subr.bf16.mxu0 0
        %1386 = vmatpush1.bf16.xpose.msra.mxu0 0
        %1387 = vmatprep.subr.bf16.mxu0 0
        %1388 = vmatpush1.bf16.xpose.msra.mxu0 0
        %1389 = vmatprep.subr.bf16.mxu0 0
        %1390 = vmatpush1.bf16.xpose.msra.mxu0 0
        %1391 = vmatprep.subr.bf16.mxu0 0
        %1392 = vmatpush1.bf16.xpose.msra.mxu0 0
        %1393 = vmatprep.subr.bf16.mxu0 0
        %1394 = vmatpush1.bf16.xpose.msra.mxu0 0
        %1395 = vmatprep.subr.bf16.mxu0 0
        %1396 = vmatpush1.bf16.xpose.msra.mxu0 0
        %1397 = vmatprep.subr.bf16.mxu0 0
        %1398 = vmatpush1.bf16.xpose.msra.mxu0 0
        %1399 = vmatprep.subr.bf16.mxu0 0
        %1400 = vmatpush1.bf16.xpose.msra.mxu0 0
        %1401 = vmatprep.subr.bf16.mxu0 0
        %1402 = vmatpush1.bf16.xpose.msra.mxu0 0
        %1403 = vmatprep.subr.bf16.mxu0 0
        %1404 = vmatpush1.bf16.xpose.msra.mxu0 0
        %1405 = vmatprep.subr.bf16.mxu0 0
        %1406 = vmatpush1.bf16.xpose.msra.mxu0 0
        %1407 = vmatprep.subr.bf16.mxu0 0
        %1408 = vmatpush1.bf16.xpose.msra.mxu0 0
        %1409 = vmatprep.mubr.bf16.mxu0 0
        %1410 = vmatmul.mubr.bf16.gmra.mrb[0].mxu0 %v1372
        %v1411 = vpop.f32.mrb[0].mxu0
        %v1412 = vadd.f32 0.0, %v1411
        %v1413 = vpop.f32.mrb[0].mxu0
        %v1414 = vpop.f32.mrb[0].mxu0
        %v1415 = vpop.f32.mrb[0].mxu0
        %1416 = vdwg.mxu0
        %v1418 = vsel %vm1278, %v1180, 0
        %v1421 = vsel %vm1278, %v1270, 0
        %1423 = vmatprep.subr.bf16.mxu0 0
        %1424 = vmatpush1.bf16.xpose.msra.mxu0 %v1421
        %1425 = vmatprep.subr.bf16.mxu0 0
        %1426 = vmatpush1.bf16.xpose.msra.mxu0 0
        %1427 = vmatprep.subr.bf16.mxu0 0
        %1428 = vmatpush1.bf16.xpose.msra.mxu0 0
        %1429 = vmatprep.subr.bf16.mxu0 0
        %1430 = vmatpush1.bf16.xpose.msra.mxu0 0
        %1431 = vmatprep.subr.bf16.mxu0 0
        %1432 = vmatpush1.bf16.xpose.msra.mxu0 0
        %1433 = vmatprep.subr.bf16.mxu0 0
        %1434 = vmatpush1.bf16.xpose.msra.mxu0 0
        %1435 = vmatprep.subr.bf16.mxu0 0
        %1436 = vmatpush1.bf16.xpose.msra.mxu0 0
        %1437 = vmatprep.subr.bf16.mxu0 0
        %1438 = vmatpush1.bf16.xpose.msra.mxu0 0
        %1439 = vmatprep.subr.bf16.mxu0 0
        %1440 = vmatpush1.bf16.xpose.msra.mxu0 0
        %1441 = vmatprep.subr.bf16.mxu0 0
        %1442 = vmatpush1.bf16.xpose.msra.mxu0 0
        %1443 = vmatprep.subr.bf16.mxu0 0
        %1444 = vmatpush1.bf16.xpose.msra.mxu0 0
        %1445 = vmatprep.subr.bf16.mxu0 0
        %1446 = vmatpush1.bf16.xpose.msra.mxu0 0
        %1447 = vmatprep.subr.bf16.mxu0 0
        %1448 = vmatpush1.bf16.xpose.msra.mxu0 0
        %1449 = vmatprep.subr.bf16.mxu0 0
        %1450 = vmatpush1.bf16.xpose.msra.mxu0 0
        %1451 = vmatprep.subr.bf16.mxu0 0
        %1452 = vmatpush1.bf16.xpose.msra.mxu0 0
        %1453 = vmatprep.subr.bf16.mxu0 0
        %1454 = vmatpush1.bf16.xpose.msra.mxu0 0
        %1455 = vmatprep.mubr.bf16.mxu0 0
        %1456 = vmatmul.mubr.bf16.gmra.mrb[0].mxu0 %v1418
        %v1457 = vpop.f32.mrb[0].mxu0
        %v1458 = vadd.f32 0.0, %v1457
        %v1459 = vpop.f32.mrb[0].mxu0
        %v1460 = vpop.f32.mrb[0].mxu0
        %v1461 = vpop.f32.mrb[0].mxu0
        %1462 = vdwg.mxu0
        %v1463 = vsel %vm1278, %v1320, -inf
        %1464 = vmax.xlane.f32.xlu0 %v1463
        %v1465 = vpop.xlane.xlu0 %1464
        %v1466 = vsel %vm1278, %v1366, -inf
        %1467 = vmax.xlane.f32.xlu0 %v1466
        %v1468 = vpop.xlane.xlu0 %1467
        %v1469 = vsel %vm1278, %v1412, -inf
        %1470 = vmax.xlane.f32.xlu0 %v1469
        %v1471 = vpop.xlane.xlu0 %1470
        %v1472 = vsel %vm1278, %v1458, -inf
        %1473 = vmax.xlane.f32.xlu0 %v1472
        %v1474 = vpop.xlane.xlu0 %1473
        %v1475 = vsub.f32 %v1320, %v1465
        %v1476 = vsub.f32 %v1366, %v1468
        %v1477 = vsub.f32 %v1412, %v1471
        %v1478 = vsub.f32 %v1458, %v1474
        %v1479 = vmul.f32 %v1475, 1.442695
        %v1480 = vpow.pop %v1479
        %v1481 = vmul.f32 %v1476, 1.442695
        %v1482 = vpow.pop %v1481
        %v1483 = vmul.f32 %v1477, 1.442695
        %v1484 = vpow.pop %v1483
        %v1485 = vmul.f32 %v1478, 1.442695
        %v1486 = vpow.pop %v1485
        %v1487 = vsel %vm1278, %v1480, 0.0
        %1488 = vadd.xlane.f32.xlu0 %v1487
        %v1489 = vpop.xlane.xlu0 %1488
        %v1490 = vsel %vm1278, %v1482, 0.0
        %1491 = vadd.xlane.f32.xlu0 %v1490
        %v1492 = vpop.xlane.xlu0 %1491
        %v1493 = vsel %vm1278, %v1484, 0.0
        %1494 = vadd.xlane.f32.xlu0 %v1493
        %v1495 = vpop.xlane.xlu0 %1494
        %v1496 = vsel %vm1278, %v1486, 0.0
        %1497 = vadd.xlane.f32.xlu0 %v1496
        %v1498 = vpop.xlane.xlu0 %1497
        %v1499 = vrcp.pop %v1489
        %v1500 = vrcp.pop %v1492
        %v1501 = vrcp.pop %v1495
        %v1502 = vrcp.pop %v1498
        %v1503 = vmul.f32 %v1480, %v1499
        %v1504 = vmul.f32 %v1482, %v1500
        %v1505 = vmul.f32 %v1484, %v1501
        %v1506 = vmul.f32 %v1486, %v1502
        %v1507 = vpack.c.bf16 %v1503, %v1503
        %v1508 = vpack.c.bf16 %v1504, %v1504
        %v1509 = vpack.c.bf16 %v1505, %v1505
        %v1510 = vpack.c.bf16 %v1506, %v1506
        %v1512 = vsel %vm1278, %v1507, 0
        %vm1514 = vcmask 1043456
        %v1516 = vsel %vm1514, %v1084, 0
        %1518 = vmatprep.subr.bf16.mxu0 0
        %1519 = vmatpush1.bf16.msra.mxu0 %v1516
        %1520 = vmatprep.subr.bf16.mxu0 0
        %1521 = vmatpush1.bf16.msra.mxu0 0
        %1522 = vmatprep.subr.bf16.mxu0 0
        %1523 = vmatpush1.bf16.msra.mxu0 0
        %1524 = vmatprep.subr.bf16.mxu0 0
        %1525 = vmatpush1.bf16.msra.mxu0 0
        %1526 = vmatprep.subr.bf16.mxu0 0
        %1527 = vmatpush1.bf16.msra.mxu0 0
        %1528 = vmatprep.subr.bf16.mxu0 0
        %1529 = vmatpush1.bf16.msra.mxu0 0
        %1530 = vmatprep.subr.bf16.mxu0 0
        %1531 = vmatpush1.bf16.msra.mxu0 0
        %1532 = vmatprep.subr.bf16.mxu0 0
        %1533 = vmatpush1.bf16.msra.mxu0 0
        %1534 = vmatprep.subr.bf16.mxu0 0
        %1535 = vmatpush1.bf16.msra.mxu0 0
        %1536 = vmatprep.subr.bf16.mxu0 0
        %1537 = vmatpush1.bf16.msra.mxu0 0
        %1538 = vmatprep.subr.bf16.mxu0 0
        %1539 = vmatpush1.bf16.msra.mxu0 0
        %1540 = vmatprep.subr.bf16.mxu0 0
        %1541 = vmatpush1.bf16.msra.mxu0 0
        %1542 = vmatprep.subr.bf16.mxu0 0
        %1543 = vmatpush1.bf16.msra.mxu0 0
        %1544 = vmatprep.subr.bf16.mxu0 0
        %1545 = vmatpush1.bf16.msra.mxu0 0
        %1546 = vmatprep.subr.bf16.mxu0 0
        %1547 = vmatpush1.bf16.msra.mxu0 0
        %1548 = vmatprep.subr.bf16.mxu0 0
        %1549 = vmatpush1.bf16.msra.mxu0 0
        %1550 = vmatprep.mubr.bf16.mxu0 0
        %1551 = vmatmul.mubr.bf16.gmra.mrb[0].mxu0 %v1512
        %v1552 = vpop.f32.mrb[0].mxu0
        %v1553 = vadd.f32 0.0, %v1552
        %v1554 = vpop.f32.mrb[0].mxu0
        %v1555 = vpop.f32.mrb[0].mxu0
        %v1556 = vpop.f32.mrb[0].mxu0
        %1557 = vdwg.mxu0
        %v1559 = vsel %vm1278, %v1508, 0
        %v1562 = vsel %vm1514, %v1273, 0
        %1564 = vmatprep.subr.bf16.mxu0 0
        %1565 = vmatpush1.bf16.msra.mxu0 %v1562
        %1566 = vmatprep.subr.bf16.mxu0 0
        %1567 = vmatpush1.bf16.msra.mxu0 0
        %1568 = vmatprep.subr.bf16.mxu0 0
        %1569 = vmatpush1.bf16.msra.mxu0 0
        %1570 = vmatprep.subr.bf16.mxu0 0
        %1571 = vmatpush1.bf16.msra.mxu0 0
        %1572 = vmatprep.subr.bf16.mxu0 0
        %1573 = vmatpush1.bf16.msra.mxu0 0
        %1574 = vmatprep.subr.bf16.mxu0 0
        %1575 = vmatpush1.bf16.msra.mxu0 0
        %1576 = vmatprep.subr.bf16.mxu0 0
        %1577 = vmatpush1.bf16.msra.mxu0 0
        %1578 = vmatprep.subr.bf16.mxu0 0
        %1579 = vmatpush1.bf16.msra.mxu0 0
        %1580 = vmatprep.subr.bf16.mxu0 0
        %1581 = vmatpush1.bf16.msra.mxu0 0
        %1582 = vmatprep.subr.bf16.mxu0 0
        %1583 = vmatpush1.bf16.msra.mxu0 0
        %1584 = vmatprep.subr.bf16.mxu0 0
        %1585 = vmatpush1.bf16.msra.mxu0 0
        %1586 = vmatprep.subr.bf16.mxu0 0
        %1587 = vmatpush1.bf16.msra.mxu0 0
        %1588 = vmatprep.subr.bf16.mxu0 0
        %1589 = vmatpush1.bf16.msra.mxu0 0
        %1590 = vmatprep.subr.bf16.mxu0 0
        %1591 = vmatpush1.bf16.msra.mxu0 0
        %1592 = vmatprep.subr.bf16.mxu0 0
        %1593 = vmatpush1.bf16.msra.mxu0 0
        %1594 = vmatprep.subr.bf16.mxu0 0
        %1595 = vmatpush1.bf16.msra.mxu0 0
        %1596 = vmatprep.mubr.bf16.mxu0 0
        %1597 = vmatmul.mubr.bf16.gmra.mrb[0].mxu0 %v1559
        %v1598 = vpop.f32.mrb[0].mxu0
        %v1599 = vadd.f32 0.0, %v1598
        %v1600 = vpop.f32.mrb[0].mxu0
        %v1601 = vpop.f32.mrb[0].mxu0
        %v1602 = vpop.f32.mrb[0].mxu0
        %1603 = vdwg.mxu0
        %v1605 = vsel %vm1278, %v1509, 0
        %v1608 = vsel %vm1514, %v1275, 0
        %1610 = vmatprep.subr.bf16.mxu0 0
        %1611 = vmatpush1.bf16.msra.mxu0 %v1608
        %1612 = vmatprep.subr.bf16.mxu0 0
        %1613 = vmatpush1.bf16.msra.mxu0 0
        %1614 = vmatprep.subr.bf16.mxu0 0
        %1615 = vmatpush1.bf16.msra.mxu0 0
        %1616 = vmatprep.subr.bf16.mxu0 0
        %1617 = vmatpush1.bf16.msra.mxu0 0
        %1618 = vmatprep.subr.bf16.mxu0 0
        %1619 = vmatpush1.bf16.msra.mxu0 0
        %1620 = vmatprep.subr.bf16.mxu0 0
        %1621 = vmatpush1.bf16.msra.mxu0 0
        %1622 = vmatprep.subr.bf16.mxu0 0
        %1623 = vmatpush1.bf16.msra.mxu0 0
        %1624 = vmatprep.subr.bf16.mxu0 0
        %1625 = vmatpush1.bf16.msra.mxu0 0
        %1626 = vmatprep.subr.bf16.mxu0 0
        %1627 = vmatpush1.bf16.msra.mxu0 0
        %1628 = vmatprep.subr.bf16.mxu0 0
        %1629 = vmatpush1.bf16.msra.mxu0 0
        %1630 = vmatprep.subr.bf16.mxu0 0
        %1631 = vmatpush1.bf16.msra.mxu0 0
        %1632 = vmatprep.subr.bf16.mxu0 0
        %1633 = vmatpush1.bf16.msra.mxu0 0
        %1634 = vmatprep.subr.bf16.mxu0 0
        %1635 = vmatpush1.bf16.msra.mxu0 0
        %1636 = vmatprep.subr.bf16.mxu0 0
        %1637 = vmatpush1.bf16.msra.mxu0 0
        %1638 = vmatprep.subr.bf16.mxu0 0
        %1639 = vmatpush1.bf16.msra.mxu0 0
        %1640 = vmatprep.subr.bf16.mxu0 0
        %1641 = vmatpush1.bf16.msra.mxu0 0
        %1642 = vmatprep.mubr.bf16.mxu0 0
        %1643 = vmatmul.mubr.bf16.gmra.mrb[0].mxu0 %v1605
        %v1644 = vpop.f32.mrb[0].mxu0
        %v1645 = vadd.f32 0.0, %v1644
        %v1646 = vpop.f32.mrb[0].mxu0
        %v1647 = vpop.f32.mrb[0].mxu0
        %v1648 = vpop.f32.mrb[0].mxu0
        %1649 = vdwg.mxu0
        %v1651 = vsel %vm1278, %v1510, 0
        %v1654 = vsel %vm1514, %v1277, 0
        %1656 = vmatprep.subr.bf16.mxu0 0
        %1657 = vmatpush1.bf16.msra.mxu0 %v1654
        %1658 = vmatprep.subr.bf16.mxu0 0
        %1659 = vmatpush1.bf16.msra.mxu0 0
        %1660 = vmatprep.subr.bf16.mxu0 0
        %1661 = vmatpush1.bf16.msra.mxu0 0
        %1662 = vmatprep.subr.bf16.mxu0 0
        %1663 = vmatpush1.bf16.msra.mxu0 0
        %1664 = vmatprep.subr.bf16.mxu0 0
        %1665 = vmatpush1.bf16.msra.mxu0 0
        %1666 = vmatprep.subr.bf16.mxu0 0
        %1667 = vmatpush1.bf16.msra.mxu0 0
        %1668 = vmatprep.subr.bf16.mxu0 0
        %1669 = vmatpush1.bf16.msra.mxu0 0
        %1670 = vmatprep.subr.bf16.mxu0 0
        %1671 = vmatpush1.bf16.msra.mxu0 0
        %1672 = vmatprep.subr.bf16.mxu0 0
        %1673 = vmatpush1.bf16.msra.mxu0 0
        %1674 = vmatprep.subr.bf16.mxu0 0
        %1675 = vmatpush1.bf16.msra.mxu0 0
        %1676 = vmatprep.subr.bf16.mxu0 0
        %1677 = vmatpush1.bf16.msra.mxu0 0
        %1678 = vmatprep.subr.bf16.mxu0 0
        %1679 = vmatpush1.bf16.msra.mxu0 0
        %1680 = vmatprep.subr.bf16.mxu0 0
        %1681 = vmatpush1.bf16.msra.mxu0 0
        %1682 = vmatprep.subr.bf16.mxu0 0
        %1683 = vmatpush1.bf16.msra.mxu0 0
        %1684 = vmatprep.subr.bf16.mxu0 0
        %1685 = vmatpush1.bf16.msra.mxu0 0
        %1686 = vmatprep.subr.bf16.mxu0 0
        %1687 = vmatpush1.bf16.msra.mxu0 0
        %1688 = vmatprep.mubr.bf16.mxu0 0
        %1689 = vmatmul.mubr.bf16.gmra.mrb[0].mxu0 %v1651
        %v1690 = vpop.f32.mrb[0].mxu0
        %v1691 = vadd.f32 0.0, %v1690
        %v1692 = vpop.f32.mrb[0].mxu0
        %v1693 = vpop.f32.mrb[0].mxu0
        %v1694 = vpop.f32.mrb[0].mxu0
        %1695 = vdwg.mxu0
        %1697 = vrot.lane.b32.xlu0 %v1599, 8
        %v1698 = vpop.permute.xlu0 %1697
        %1701 = vrot.lane.b32.xlu0 %v1645, 16
        %v1702 = vpop.permute.xlu0 %1701
        %1705 = vrot.lane.b32.xlu0 %v1691, 24
        %v1706 = vpop.permute.xlu0 %1705
        %v1708 = vsel %vm1278, %v1553, %v1698
        %vm1709 = vcmask 130048
        %v1710 = vsel %vm1709, %v1708, %v1702
        %vm1711 = vcmask 195584
        %v1712 = vsel %vm1711, %v1710, %v1706
        %v1713 = vpack.c.bf16 %v1712, %v1712
        %v1714 = vld [vmem:[%s740] sm:$0xf]
        %v1715 = vld [vmem:[%s740 + $0x4] sm:$0xf]
        %v1716 = vld [vmem:[%s740 + $0x8] sm:$0xf]
        %v1717 = vld [vmem:[%s740 + $0xc] sm:$0xf]
        %v1722 = vunpack.c.l.b16 %v1714
        %v1723 = vunpack.c.l.b16 %v1715
        %v1724 = vunpack.c.l.b16 %v1716
        %v1725 = vunpack.c.l.b16 %v1717
        %v1726 = vpack.c.b16 %v1723, %v1722
        %v1727 = vpack.c.b16 %v1725, %v1724
        %v1731 = vsel %vm896, %v1713, 0
        %1733 = vmatprep.subr.bf16.mxu0 0
        %1734 = vmatpush1.bf16.msra.mxu0 %v1726
        %1735 = vmatprep.subr.bf16.mxu0 0
        %1736 = vmatpush1.bf16.msra.mxu0 %v1727
        %1737 = vmatprep.subr.bf16.mxu0 0
        %1738 = vmatpush1.bf16.msra.mxu0 0
        %1739 = vmatprep.subr.bf16.mxu0 0
        %1740 = vmatpush1.bf16.msra.mxu0 0
        %1741 = vmatprep.subr.bf16.mxu0 0
        %1742 = vmatpush1.bf16.msra.mxu0 0
        %1743 = vmatprep.subr.bf16.mxu0 0
        %1744 = vmatpush1.bf16.msra.mxu0 0
        %1745 = vmatprep.subr.bf16.mxu0 0
        %1746 = vmatpush1.bf16.msra.mxu0 0
        %1747 = vmatprep.subr.bf16.mxu0 0
        %1748 = vmatpush1.bf16.msra.mxu0 0
        %1749 = vmatprep.subr.bf16.mxu0 0
        %1750 = vmatpush1.bf16.msra.mxu0 0
        %1751 = vmatprep.subr.bf16.mxu0 0
        %1752 = vmatpush1.bf16.msra.mxu0 0
        %1753 = vmatprep.subr.bf16.mxu0 0
        %1754 = vmatpush1.bf16.msra.mxu0 0
        %1755 = vmatprep.subr.bf16.mxu0 0
        %1756 = vmatpush1.bf16.msra.mxu0 0
        %1757 = vmatprep.subr.bf16.mxu0 0
        %1758 = vmatpush1.bf16.msra.mxu0 0
        %1759 = vmatprep.subr.bf16.mxu0 0
        %1760 = vmatpush1.bf16.msra.mxu0 0
        %1761 = vmatprep.subr.bf16.mxu0 0
        %1762 = vmatpush1.bf16.msra.mxu0 0
        %1763 = vmatprep.subr.bf16.mxu0 0
        %1764 = vmatpush1.bf16.msra.mxu0 0
        %1765 = vmatprep.mubr.bf16.mxu0 0
        %1766 = vmatmul.mubr.bf16.gmra.mrb[0].mxu0 %v1731
        %v1767 = vpop.f32.mrb[0].mxu0
        %v1768 = vadd.f32 0.0, %v1767
        %v1769 = vpop.f32.mrb[0].mxu0
        %v1770 = vpop.f32.mrb[0].mxu0
        %v1771 = vpop.f32.mrb[0].mxu0
        %1772 = vdwg.mxu0
        %v1773 = vadd.f32 %v890, %v1768
        %v1774 = vld [vmem:[%s748] sm:$0x1]
        %v1775 = vmul.f32 %v1773, %v1773
        %v1776 = vsel %vm896, %v1775, 0.0
        %1777 = vadd.xlane.f32.xlu0 %v1776
        %v1778 = vpop.xlane.xlu0 %1777
        %v1779 = vmul.f32 %v1778, %v900
        %v1780 = vadd.f32 %v1779, 1e-05
        %v1781 = vrsqrt.pop %v1780
        %v1782 = vmul.f32 %v1773, %v1781
        %v1784 = vlaneseq
        %v1785 = vshrl.u32 %v1784, 7
        %v1786 = vsub.s32 0, %v1785
        %v1787 = vrot.slane %v1774, %v1786
        %v1789 = vmul.f32 %v1782, %v1787
        %v1790 = vpack.c.bf16 %v1789, %v1789
        %v1791 = vld [vmem:[%s757] sm:$0xf]
        %v1792 = vld [vmem:[%s757 + $0x4] sm:$0xf]
        %v1793 = vld [vmem:[%s757 + $0x8] sm:$0xf]
        %v1794 = vld [vmem:[%s757 + $0xc] sm:$0xf]
        %v1799 = vunpack.c.l.b16 %v1791
        %v1800 = vunpack.c.l.b16 %v1792
        %v1801 = vunpack.c.l.b16 %v1793
        %v1802 = vunpack.c.l.b16 %v1794
        %v1803 = vpack.c.b16 %v1800, %v1799
        %v1804 = vpack.c.b16 %v1802, %v1801
        %v1808 = vsel %vm896, %v1790, 0
        %1810 = vmatprep.subr.bf16.mxu0 0
        %1811 = vmatpush1.bf16.msra.mxu0 %v1803
        %1812 = vmatprep.subr.bf16.mxu0 0
        %1813 = vmatpush1.bf16.msra.mxu0 %v1804
        %1814 = vmatprep.subr.bf16.mxu0 0
        %1815 = vmatpush1.bf16.msra.mxu0 0
        %1816 = vmatprep.subr.bf16.mxu0 0
        %1817 = vmatpush1.bf16.msra.mxu0 0
        %1818 = vmatprep.subr.bf16.mxu0 0
        %1819 = vmatpush1.bf16.msra.mxu0 0
        %1820 = vmatprep.subr.bf16.mxu0 0
        %1821 = vmatpush1.bf16.msra.mxu0 0
        %1822 = vmatprep.subr.bf16.mxu0 0
        %1823 = vmatpush1.bf16.msra.mxu0 0
        %1824 = vmatprep.subr.bf16.mxu0 0
        %1825 = vmatpush1.bf16.msra.mxu0 0
        %1826 = vmatprep.subr.bf16.mxu0 0
        %1827 = vmatpush1.bf16.msra.mxu0 0
        %1828 = vmatprep.subr.bf16.mxu0 0
        %1829 = vmatpush1.bf16.msra.mxu0 0
        %1830 = vmatprep.subr.bf16.mxu0 0
        %1831 = vmatpush1.bf16.msra.mxu0 0
        %1832 = vmatprep.subr.bf16.mxu0 0
        %1833 = vmatpush1.bf16.msra.mxu0 0
        %1834 = vmatprep.subr.bf16.mxu0 0
        %1835 = vmatpush1.bf16.msra.mxu0 0
        %1836 = vmatprep.subr.bf16.mxu0 0
        %1837 = vmatpush1.bf16.msra.mxu0 0
        %1838 = vmatprep.subr.bf16.mxu0 0
        %1839 = vmatpush1.bf16.msra.mxu0 0
        %1840 = vmatprep.subr.bf16.mxu0 0
        %1841 = vmatpush1.bf16.msra.mxu0 0
        %1842 = vmatprep.mubr.bf16.mxu0 0
        %1843 = vmatmul.mubr.bf16.gmra.mrb[0].mxu0 %v1808
        %v1844 = vpop.f32.mrb[0].mxu0
        %v1845 = vadd.f32 0.0, %v1844
        %v1846 = vpop.f32.mrb[0].mxu0
        %v1847 = vpop.f32.mrb[0].mxu0
        %v1848 = vpop.f32.mrb[0].mxu0
        %1849 = vdwg.mxu0
        %v1850 = vld [vmem:[%s766] sm:$0xf]
        %v1851 = vld [vmem:[%s766 + $0x4] sm:$0xf]
        %v1852 = vld [vmem:[%s766 + $0x8] sm:$0xf]
        %v1853 = vld [vmem:[%s766 + $0xc] sm:$0xf]
        %v1858 = vunpack.c.l.b16 %v1850
        %v1859 = vunpack.c.l.b16 %v1851
        %v1860 = vunpack.c.l.b16 %v1852
        %v1861 = vunpack.c.l.b16 %v1853
        %v1862 = vpack.c.b16 %v1859, %v1858
        %v1863 = vpack.c.b16 %v1861, %v1860
        %1866 = vmatprep.subr.bf16.mxu0 0
        %1867 = vmatpush1.bf16.msra.mxu0 %v1862
        %1868 = vmatprep.subr.bf16.mxu0 0
        %1869 = vmatpush1.bf16.msra.mxu0 %v1863
        %1870 = vmatprep.subr.bf16.mxu0 0
        %1871 = vmatpush1.bf16.msra.mxu0 0
        %1872 = vmatprep.subr.bf16.mxu0 0
        %1873 = vmatpush1.bf16.msra.mxu0 0
        %1874 = vmatprep.subr.bf16.mxu0 0
        %1875 = vmatpush1.bf16.msra.mxu0 0
        %1876 = vmatprep.subr.bf16.mxu0 0
        %1877 = vmatpush1.bf16.msra.mxu0 0
        %1878 = vmatprep.subr.bf16.mxu0 0
        %1879 = vmatpush1.bf16.msra.mxu0 0
        %1880 = vmatprep.subr.bf16.mxu0 0
        %1881 = vmatpush1.bf16.msra.mxu0 0
        %1882 = vmatprep.subr.bf16.mxu0 0
        %1883 = vmatpush1.bf16.msra.mxu0 0
        %1884 = vmatprep.subr.bf16.mxu0 0
        %1885 = vmatpush1.bf16.msra.mxu0 0
        %1886 = vmatprep.subr.bf16.mxu0 0
        %1887 = vmatpush1.bf16.msra.mxu0 0
        %1888 = vmatprep.subr.bf16.mxu0 0
        %1889 = vmatpush1.bf16.msra.mxu0 0
        %1890 = vmatprep.subr.bf16.mxu0 0
        %1891 = vmatpush1.bf16.msra.mxu0 0
        %1892 = vmatprep.subr.bf16.mxu0 0
        %1893 = vmatpush1.bf16.msra.mxu0 0
        %1894 = vmatprep.subr.bf16.mxu0 0
        %1895 = vmatpush1.bf16.msra.mxu0 0
        %1896 = vmatprep.subr.bf16.mxu0 0
        %1897 = vmatpush1.bf16.msra.mxu0 0
        %1898 = vmatprep.mubr.bf16.mxu0 0
        %1899 = vmatmul.mubr.bf16.gmra.mrb[0].mxu0 %v1808
        %v1900 = vpop.f32.mrb[0].mxu0
        %v1901 = vadd.f32 0.0, %v1900
        %v1902 = vpop.f32.mrb[0].mxu0
        %v1903 = vpop.f32.mrb[0].mxu0
        %v1904 = vpop.f32.mrb[0].mxu0
        %1905 = vdwg.mxu0
        %v1906 = vxor.u32 %v1845, 2147483648
        %v1907 = vmul.f32 %v1906, 1.442695
        %v1908 = vpow.pop %v1907
        %v1909 = vadd.f32 %v1908, 1.0
        %v1910 = vrcp.pop %v1909
        %v1911 = vmul.f32 1.0, %v1910
        %v1912 = vmul.f32 %v1845, %v1911
        %v1913 = vmul.f32 %v1912, %v1901
        %v1914 = vpack.c.bf16 %v1913, %v1913
        %v1915 = vld [vmem:[%s775] sm:$0xf]
        %v1916 = vld [vmem:[%s775 + $0x4] sm:$0xf]
        %v1917 = vld [vmem:[%s775 + $0x8] sm:$0xf]
        %v1918 = vld [vmem:[%s775 + $0xc] sm:$0xf]
        %v1919 = vld [vmem:[%s775 + $0x10] sm:$0xf]
        %v1920 = vld [vmem:[%s775 + $0x14] sm:$0xf]
        %v1921 = vld [vmem:[%s775 + $0x18] sm:$0xf]
        %v1922 = vld [vmem:[%s775 + $0x1c] sm:$0xf]
        %v1923 = vld [vmem:[%s775 + $0x20] sm:$0xf]
        %v1924 = vld [vmem:[%s775 + $0x24] sm:$0xf]
        %v1925 = vld [vmem:[%s775 + $0x28] sm:$0xf]
        %v1926 = vld [vmem:[%s775 + $0x2c] sm:$0xf]
        %v1939 = vunpack.c.l.b16 %v1915
        %v1940 = vunpack.c.l.b16 %v1916
        %v1941 = vunpack.c.l.b16 %v1917
        %v1942 = vunpack.c.l.b16 %v1918
        %v1943 = vunpack.c.l.b16 %v1919
        %v1944 = vunpack.c.l.b16 %v1920
        %v1945 = vunpack.c.l.b16 %v1921
        %v1946 = vunpack.c.l.b16 %v1922
        %v1947 = vunpack.c.l.b16 %v1923
        %v1948 = vunpack.c.l.b16 %v1924
        %v1949 = vunpack.c.l.b16 %v1925
        %v1950 = vunpack.c.l.b16 %v1926
        %v1951 = vpack.c.b16 %v1940, %v1939
        %v1952 = vpack.c.b16 %v1942, %v1941
        %v1953 = vpack.c.b16 %v1944, %v1943
        %v1954 = vpack.c.b16 %v1946, %v1945
        %v1955 = vpack.c.b16 %v1948, %v1947
        %v1956 = vpack.c.b16 %v1950, %v1949
        %vm1963 = vcmask 785408
        %v1965 = vsel %vm1963, %v1914, 0
        %1967 = vmatprep.subr.bf16.mxu0 0
        %1968 = vmatpush1.bf16.msra.mxu0 %v1951
        %1969 = vmatprep.subr.bf16.mxu0 0
        %1970 = vmatpush1.bf16.msra.mxu0 %v1952
        %1971 = vmatprep.subr.bf16.mxu0 0
        %1972 = vmatpush1.bf16.msra.mxu0 %v1953
        %1973 = vmatprep.subr.bf16.mxu0 0
        %1974 = vmatpush1.bf16.msra.mxu0 %v1954
        %1975 = vmatprep.subr.bf16.mxu0 0
        %1976 = vmatpush1.bf16.msra.mxu0 %v1955
        %1977 = vmatprep.subr.bf16.mxu0 0
        %1978 = vmatpush1.bf16.msra.mxu0 %v1956
        %1979 = vmatprep.subr.bf16.mxu0 0
        %1980 = vmatpush1.bf16.msra.mxu0 0
        %1981 = vmatprep.subr.bf16.mxu0 0
        %1982 = vmatpush1.bf16.msra.mxu0 0
        %1983 = vmatprep.subr.bf16.mxu0 0
        %1984 = vmatpush1.bf16.msra.mxu0 0
        %1985 = vmatprep.subr.bf16.mxu0 0
        %1986 = vmatpush1.bf16.msra.mxu0 0
        %1987 = vmatprep.subr.bf16.mxu0 0
        %1988 = vmatpush1.bf16.msra.mxu0 0
        %1989 = vmatprep.subr.bf16.mxu0 0
        %1990 = vmatpush1.bf16.msra.mxu0 0
        %1991 = vmatprep.subr.bf16.mxu0 0
        %1992 = vmatpush1.bf16.msra.mxu0 0
        %1993 = vmatprep.subr.bf16.mxu0 0
        %1994 = vmatpush1.bf16.msra.mxu0 0
        %1995 = vmatprep.subr.bf16.mxu0 0
        %1996 = vmatpush1.bf16.msra.mxu0 0
        %1997 = vmatprep.subr.bf16.mxu0 0
        %1998 = vmatpush1.bf16.msra.mxu0 0
        %1999 = vmatprep.mubr.bf16.mxu0 0
        %2000 = vmatmul.mubr.bf16.gmra.mrb[0].mxu0 %v1965
        %v2001 = vpop.f32.mrb[0].mxu0
        %v2002 = vadd.f32 0.0, %v2001
        %v2003 = vpop.f32.mrb[0].mxu0
        %v2004 = vpop.f32.mrb[0].mxu0
        %v2005 = vpop.f32.mrb[0].mxu0
        %2006 = vdwg.mxu0
        %v2007 = vadd.f32 %v1773, %v2002
        %2008 = vst.msk [vmem:[%s872] sm:$0xff] %vm896, %v2007
        %s2009 = sand.u32 %s412, 1
        %s2010 = scalar_lea.sflag [#allocation6], %s2009
        %s2011 = sand.u32 %s412, 1
        %s2012 = smul.addr %s2011, 8
        %s2013 = scalar_lea.vmem [#allocation25], %s2012
        // Predicated region
        $region129: #{tpu_custom_call.1} parent=71 // pred_check
          %p2014 = pneg %p422
        $region130: #{tpu_custom_call.1} parent=71 // pred_check_branch
          %2016 = sbr.rel (%p2014) target = $region132
        $region131: #{tpu_custom_call.1} parent=71 // pred_region
          %s2018 = ssub.s32 128, 128
          %2019 = vsyncadd %s2010, %s2018
          %s2020 = smul.addr %s55, 128
          %s2021 = scalar_lea.hbm %s14, %s2020
          %s2023 = sshll.u32 %s2013, 4
          %s2024 = int_to_ptr.vmem [resolvable:$true] %s2023
          %2026 = dma.vmem_to_hbm [thread:$0]  %s2024, 128, %s2021, %s2010
        $region132: #{tpu_custom_call.1} parent=71 // pred_fallthru
          _
      $region72: #{tpu_custom_call.1} parent=5 // pred_fallthru
        _
      %p2027 = scmp.le.s32.totalorder 2, %s46
      // Predicated region
      $region133: #{tpu_custom_call.1} parent=5 // pred_check
        %p2028 = pneg %p2027
      $region134: #{tpu_custom_call.1} parent=5 // pred_check_branch
        %2030 = sbr.rel (%p2028) target = $region136
      $region135: #{tpu_custom_call.1} parent=5 // pred_region
        %s2031 = ssub.s32 %s46, 2
        // Predicated region
        $region137: #{tpu_custom_call.1} parent=135 // pred_check
          %p2032 = pneg %p428
        $region138: #{tpu_custom_call.1} parent=135 // pred_check_branch
          %2034 = sbr.rel (%p2032) target = $region140
        $region139: #{tpu_custom_call.1} parent=135 // pred_region
          %s2035 = sand.u32 %s413, 1
          %s2036 = scalar_lea.sflag [#allocation6], %s2035
          %s2037 = sand.u32 %s413, 1
          %s2038 = smul.addr %s2037, 8
          %s2039 = scalar_lea.vmem [#allocation25], %s2038
          %2040 = dma.done %s2036, 128
        $region140: #{tpu_custom_call.1} parent=135 // pred_fallthru
          _
      $region136: #{tpu_custom_call.1} parent=5 // pred_fallthru
        _
    $region6: #{tpu_custom_call.1} parent=1 // loop_footer
      %s50 = sadd.s32 1, %s46
    $region7: #{tpu_custom_call.1} parent=1 // loop_footer_branch
      %45 = sbr.rel target = $region3
    $region8: #{tpu_custom_call.1} parent=1 // loop_exit
      _
    %2041 = vsyncpa [#allocation5], 1
    %s2042 = scalar_lea.sflag [#allocation5], 1
    %2043 = vsyncpa %s2042, 1
    %2044 = vsyncpa [#allocation8], 1
    %s2045 = scalar_lea.sflag [#allocation8], 1
    %2046 = vsyncpa %s2045, 1
    %2047 = vsyncpa [#allocation11], 1
    %s2048 = scalar_lea.sflag [#allocation11], 1
    %2049 = vsyncpa %s2048, 1
    %2050 = vsyncpa [#allocation14], 1
    %s2051 = scalar_lea.sflag [#allocation14], 1
    %2052 = vsyncpa %s2051, 1
    %2053 = vsyncpa [#allocation17], 1
    %s2054 = scalar_lea.sflag [#allocation17], 1
    %2055 = vsyncpa %s2054, 1
    %2056 = vsyncpa [#allocation20], 1
    %s2057 = scalar_lea.sflag [#allocation20], 1
    %2058 = vsyncpa %s2057, 1
    %2059 = vsyncpa [#allocation23], 1
    %2060 = vsyncpa [#allocation6], 1
    %s2061 = scalar_lea.sflag [#allocation6], 1
    %2062 = vsyncpa %s2061, 1

</llo_original>
